<compile_context>
chip_gen: v5e
topology: v5e:2x2
jax: 0.10.0
libtpu: 0.0.40
codegen_flags: <defaults>
</compile_context>

<pallas_src>
import functools

import jax
import jax.numpy as jnp
from jax.experimental import pallas as pl
from jax.experimental.pallas import tpu as pltpu

N_SRC = 2  # number of separated sources


def _round_up(x, m):
    return ((x + m - 1) // m) * m


def _cdiv(a, b):
    return (a + b - 1) // b


def emd_kernel(x_ref, enc_ref, mask_ref, bias_ref, dec_ref, out_ref, *,
               n_src, n_grp, grp_w):
    """Fused encoder -> relu -> masker -> masking -> decoder on one super-row tile.

    x_ref    : (TR, 128)               bf16  waveform, G frames of K samples per row
    enc_ref  : (128, G*F)              bf16  G-block-diag encoder filterbank
    mask_ref : (grp_w, n_src*grp_w)    bf16  Q-block-diag masker weight (Q frames per group)
    bias_ref : (1, n_src*grp_w)        f32   masker bias (tiled over the Q frames)
    dec_ref  : (G*F, 128)              bf16  G-block-diag decoder filterbank
    out_ref  : (n_src, TR, 128)        f32/bf16  decoded waveform rows per source
    """
    x = x_ref[...]

    # Encoder: per-frame (K -> F) matmul, expressed as one lane-dense (128 -> G*F) matmul.
    tf_rep = jnp.dot(x, enc_ref[...], preferred_element_type=jnp.float32)
    # postprocess_encoded = identity; encoder_activation = relu
    tf_act = jnp.maximum(tf_rep, 0.0)
    # Cast once; reused as masker LHS and for the bf16 mask-apply (feeds the decoder MXU).
    tf16 = tf_act.astype(jnp.bfloat16)

    mask_w = mask_ref[...]
    bias = bias_ref[...]
    dec_w = dec_ref[...]

    # Masker: n_grp lane-tile-aligned group matmuls against a Q-block-diagonal weight
    # instead of one G-block-diagonal matmul (cuts masker MACs G/Q x, keeps a >=128-deep
    # contraction, and every slice below lands on a 128-lane boundary).
    chunks = [[] for _ in range(n_src)]
    for q in range(n_grp):                     # static, small (G/Q)
        lo = q * grp_w
        tf_q = tf16[:, lo:lo + grp_w]          # lane-tile-aligned slice of tf_act
        logits = jnp.dot(tf_q, mask_w, preferred_element_type=jnp.float32) + bias
        # sigmoid, with the divide on the otherwise-idle EUP (approx vrcp) instead of VALU.
        masks = pl.reciprocal(1.0 + jnp.exp(-logits), approx=True)
        masks16 = masks.astype(jnp.bfloat16)
        for s in range(n_src):
            # est_masks * tf_rep.unsqueeze(1); postprocess_masks/masked = identity.
            chunks[s].append(masks16[:, s * grp_w:(s + 1) * grp_w] * tf_q)

    # Decoder: per-source deep-contraction (G*F -> 128) matmul; each result row IS 128
    # contiguous time samples, so the output stays lane-dense with no wrapper shuffling.
    for s in range(n_src):                     # static, small
        masked = chunks[s][0] if n_grp == 1 else jnp.concatenate(chunks[s], axis=-1)
        out_ref[s] = jnp.dot(masked, dec_w,
                             preferred_element_type=jnp.float32).astype(out_ref.dtype)


@functools.partial(jax.jit, static_argnames=("kernel_size", "tile_rows", "out_dtype"))
def encoder_masker_decoder(wav, enc_w, mask_w, mask_b, dec_w, kernel_size,
                           tile_rows=512, out_dtype=jnp.float32):
    """Forward pass mirroring BaseEncoderMaskerDecoder.forward semantics.

    wav    : (T,), (B, T) or (B, 1, T) float32 waveform, time last
    enc_w  : (K, F)          encoder Conv1d weight (transposed)
    mask_w : (F, n_src*F)    masker pointwise conv weight (transposed, source-major columns)
    mask_b : (1, n_src*F)    masker bias (source-major)
    dec_w  : (F, K)          decoder ConvTranspose1d weight
    """
    was_one_d = wav.ndim == 1
    # _unsqueeze_to_3d
    if wav.ndim == 1:
        wav3 = wav.reshape(1, 1, -1)
    elif wav.ndim == 2:
        wav3 = wav[:, None, :]
    else:
        wav3 = wav

    B, _, T = wav3.shape
    K = int(kernel_size)
    F = enc_w.shape[1]
    assert 128 % K == 0 and K <= 64, "kernel assumes the filterbank kernel divides 128 (G>=2)"
    # TODO(synk): overlapping filterbanks (stride != kernel_size) need an overlap-add decoder.
    G = 128 // K                     # frames packed per lane-dense super-row
    Tf = T // K                      # number of encoder frames (stride == kernel)

    # Masker group size: smallest Q dividing G with Q*F a multiple of 128
    # (F=64 -> Q=2, F>=128 -> Q=1, i.e. zero masker inflation for wide filterbanks).
    q_cands = [q for q in range(1, G + 1) if G % q == 0 and (q * F) % 128 == 0]
    assert q_cands, "n_filters must allow a 128-lane-aligned masker grouping"
    Q = q_cands[0]
    n_grp = G // Q
    grp_w = Q * F

    rows = _cdiv(Tf, G)              # super-rows of 128 samples
    rows_pad = _round_up(rows, 16)   # bf16 sublane packing
    t_rows = max(16, (min(tile_rows, rows_pad) // 16) * 16)
    # Keep enough grid steps to feed both v7x TensorCores and the software pipeline.
    while t_rows > 16 and B * _cdiv(rows_pad, t_rows) < 4:
        t_rows = max(16, ((t_rows // 2) // 16) * 16)
    rows_pad = _round_up(rows_pad, t_rows)

    # --- lane-dense input: flat samples, zero-padded, (B, rows_pad, 128), bf16 for the MXU.
    x = wav3[:, 0, :Tf * K]
    x = jnp.pad(x, ((0, 0), (0, rows_pad * G * K - Tf * K)))
    x = x.reshape(B, rows_pad, G * K).astype(jnp.bfloat16)
    # TODO(synk): all MXU operands (incl. the waveform) are bf16 with f32 accumulation; keep
    # f32 encoder operands instead if separation quality requires tighter fidelity.

    # --- block-diagonal weight expansion (host-side, tiny) ---------------------------------
    eye_g = jnp.eye(G, dtype=jnp.float32)
    eye_q = jnp.eye(Q, dtype=jnp.float32)
    # enc_big[g*K+k, h*F+f] = delta(g,h) * enc_w[k,f]
    enc_big = jnp.einsum("gh,kf->gkhf", eye_g, enc_w).reshape(G * K, G * F)
    # mask_grp[h*F+f, s*Q*F + g*F + j] = delta(h,g) * mask_w[f, s*F+j]   (source-major cols)
    mask_grp = jnp.einsum("hg,fsj->hfsgj", eye_q,
                          mask_w.reshape(F, N_SRC, F)).reshape(grp_w, N_SRC * grp_w)
    bias_grp = jnp.broadcast_to(mask_b.reshape(N_SRC, 1, F),
                                (N_SRC, Q, F)).reshape(1, N_SRC * grp_w).astype(jnp.float32)
    # dec_big[g*F+f, g*K+k] = dec_w[f,k]  -> decode result row == 128 contiguous time samples
    dec_big = jnp.einsum("gh,fk->gfhk", eye_g, dec_w).reshape(G * F, G * K)

    enc_big = enc_big.astype(jnp.bfloat16)
    mask_grp = mask_grp.astype(jnp.bfloat16)
    dec_big = dec_big.astype(jnp.bfloat16)

    grid = (B, rows_pad // t_rows)
    kernel = functools.partial(emd_kernel, n_src=N_SRC, n_grp=n_grp, grp_w=grp_w)

    out = pl.pallas_call(
        kernel,
        out_shape=jax.ShapeDtypeStruct((B, N_SRC, rows_pad, G * K), out_dtype),
        grid_spec=pltpu.PrefetchScalarGridSpec(
            num_scalar_prefetch=0,
            grid=grid,
            in_specs=[
                pl.BlockSpec((None, t_rows, G * K), lambda b, t: (b, t, 0)),     # waveform rows
                pl.BlockSpec((G * K, G * F), lambda b, t: (0, 0)),               # enc_big (resident)
                pl.BlockSpec((grp_w, N_SRC * grp_w), lambda b, t: (0, 0)),       # mask_grp (resident)
                pl.BlockSpec((1, N_SRC * grp_w), lambda b, t: (0, 0)),           # bias (resident)
                pl.BlockSpec((G * F, G * K), lambda b, t: (0, 0)),               # dec_big (resident)
            ],
            out_specs=pl.BlockSpec((None, N_SRC, t_rows, G * K),
                                   lambda b, t: (b, 0, t, 0)),
        ),
        compiler_params=pltpu.CompilerParams(
            dimension_semantics=("parallel", "parallel"),
            vmem_limit_bytes=32 * 1024 * 1024,
        ),
    )(x, enc_big, mask_grp, bias_grp, dec_big)

    # postprocess_decoded = identity; lane-dense rows are already contiguous time samples.
    # pad_x_to_y: padded tail rows decode to exactly zero (masked = mask * 0), so just slice
    # to the input length; only pad in the rare case T exceeds the padded super-row span.
    # (This relies on the bias-free encoder and zero-preserving relu.)
    avail = rows_pad * G * K
    decoded = out.reshape(B, N_SRC, avail)
    if T <= avail:
        reconstructed = decoded[..., :T]
    else:
        reconstructed = jnp.pad(decoded, ((0, 0), (0, 0), (0, T - avail)))
    if was_one_d:
        return reconstructed[0]
    return reconstructed


def _reference(wav, enc_w, mask_w, mask_b, dec_w, K):
    """Pure-jnp float32 reference of the same forward, for a correctness check."""
    wav3 = wav[:, None, :]
    B, _, T = wav3.shape
    Tf = T // K
    frames = wav3[:, 0, :Tf * K].reshape(B, Tf, K)
    tf = jnp.maximum(jnp.einsum("btk,kf->btf", frames, enc_w), 0.0)
    logits = jnp.einsum("btf,fg->btg", tf, mask_w) + mask_b[0]
    masks = jax.nn.sigmoid(logits).reshape(B, Tf, N_SRC, -1)
    masked = masks * tf[:, :, None, :]
    dec = jnp.einsum("btsf,fk->btsk", masked, dec_w)
    dec = dec.transpose(0, 2, 1, 3).reshape(B, N_SRC, Tf * K)
    return jnp.pad(dec, ((0, 0), (0, 0), (0, T - Tf * K)))


if __name__ == "__main__":
    key = jax.random.PRNGKey(0)
    k1, k2, k3, k4, k5 = jax.random.split(key, 5)

    B, T, K, F = 2, 4096, 16, 64  # batch, time, filterbank kernel(=stride), n_filters
    wav = jax.random.normal(k1, (B, T), jnp.float32)

    # Deterministic synthetic parameters (the module's __init__ only fixes shapes).
    enc_w = 0.1 * jax.random.normal(k2, (K, F), jnp.float32)            # Conv1d(1,F,K) weight^T
    mask_w = 0.1 * jax.random.normal(k3, (F, N_SRC * F), jnp.float32)   # pointwise conv weight^T
    mask_b = 0.01 * jax.random.normal(k4, (1, N_SRC * F), jnp.float32)  # pointwise conv bias
    dec_w = 0.1 * jax.random.normal(k5, (F, K), jnp.float32)            # ConvTranspose1d(F,1,K) weight

    out = encoder_masker_decoder(wav, enc_w, mask_w, mask_b, dec_w, K)
    out = jax.block_until_ready(out)

    ref = _reference(wav, enc_w, mask_w, mask_b, dec_w, K)
    assert out.shape == (B, N_SRC, T), out.shape
    # bf16 MXU operands / bf16 mask-apply with f32 accumulation -> compare loosely vs f32 ref.
    assert jnp.allclose(out, ref, atol=2e-2, rtol=2e-2), "mismatch vs reference"

    # TODO(synk): BaseModel.separate / file / numpy / resampling helpers are host-side
    # utilities, not kernel work.
    print("KERNEL_OK")
</pallas_src>

<mosaic_0001>
module attributes {stable_mosaic.version = 11 : i64} {
  func.func @emd_kernel(%arg0: i32, %arg1: i32, %arg2: memref<1x16x128xbf16, #tpu.memory_space<vmem>>, %arg3: memref<128x512xbf16, #tpu.memory_space<vmem>>, %arg4: memref<128x256xbf16, #tpu.memory_space<vmem>>, %arg5: memref<1x256xf32, #tpu.memory_space<vmem>>, %arg6: memref<512x128xbf16, #tpu.memory_space<vmem>>, %arg7: memref<1x2x16x128xf32, #tpu.memory_space<vmem>>) attributes {dimension_semantics = [#tpu.dimension_semantics<parallel>, #tpu.dimension_semantics<parallel>], iteration_bounds = array<i64: 2, 2>, scalar_prefetch = 0 : i64, scratch_operands = 0 : i64, tpu.core_type = #tpu.core_type<tc>, window_params = [{transform_indices = @transform_0, window_bounds = array<i64: 1, 16, 128>}, {pipeline_mode = #tpu.pipeline_mode<synchronous>, transform_indices = @transform_1, window_bounds = array<i64: 128, 512>}, {pipeline_mode = #tpu.pipeline_mode<synchronous>, transform_indices = @transform_2, window_bounds = array<i64: 128, 256>}, {pipeline_mode = #tpu.pipeline_mode<synchronous>, transform_indices = @transform_3, window_bounds = array<i64: 1, 256>}, {pipeline_mode = #tpu.pipeline_mode<synchronous>, transform_indices = @transform_4, window_bounds = array<i64: 512, 128>}, {transform_indices = @transform_5, window_bounds = array<i64: 1, 2, 16, 128>}]} {
    %c0 = arith.constant 0 : index
    %c0_0 = arith.constant 0 : index
    %c0_1 = arith.constant 0 : index
    %0 = vector.load %arg2[%c0, %c0_0, %c0_1] : memref<1x16x128xbf16, #tpu.memory_space<vmem>>, vector<1x16x128xbf16>
    %1 = vector.shape_cast %0 : vector<1x16x128xbf16> to vector<16x128xbf16>
    %c0_2 = arith.constant 0 : index
    %c0_3 = arith.constant 0 : index
    %2 = vector.load %arg3[%c0_2, %c0_3] : memref<128x512xbf16, #tpu.memory_space<vmem>>, vector<128x512xbf16>
    %cst = arith.constant dense<0.000000e+00> : vector<16x512xf32>
    %3 = tpu.matmul %1, %2, %cst {dimension_numbers = #tpu.dot_dimension_numbers<[1], [0], [0], [1], [0, 0, 1, 1], [], []>} : vector<16x128xbf16>, vector<128x512xbf16>, vector<16x512xf32> -> vector<16x512xf32>
    %cst_4 = arith.constant 0.000000e+00 : f32
    %4 = vector.broadcast %cst_4 : f32 to vector<16x512xf32>
    %5 = arith.maximumf %3, %4 : vector<16x512xf32>
    %6 = arith.truncf %5 : vector<16x512xf32> to vector<16x512xbf16>
    %c0_5 = arith.constant 0 : index
    %c0_6 = arith.constant 0 : index
    %7 = vector.load %arg4[%c0_5, %c0_6] : memref<128x256xbf16, #tpu.memory_space<vmem>>, vector<128x256xbf16>
    %c0_7 = arith.constant 0 : index
    %c0_8 = arith.constant 0 : index
    %8 = vector.load %arg5[%c0_7, %c0_8] : memref<1x256xf32, #tpu.memory_space<vmem>>, vector<1x256xf32>
    %c0_9 = arith.constant 0 : index
    %c0_10 = arith.constant 0 : index
    %9 = vector.load %arg6[%c0_9, %c0_10] : memref<512x128xbf16, #tpu.memory_space<vmem>>, vector<512x128xbf16>
    %10 = vector.extract_strided_slice %6 {offsets = [0, 0], sizes = [16, 128], strides = [1, 1]} : vector<16x512xbf16> to vector<16x128xbf16>
    %cst_11 = arith.constant dense<0.000000e+00> : vector<16x256xf32>
    %11 = tpu.matmul %10, %7, %cst_11 {dimension_numbers = #tpu.dot_dimension_numbers<[1], [0], [0], [1], [0, 0, 1, 1], [], []>} : vector<16x128xbf16>, vector<128x256xbf16>, vector<16x256xf32> -> vector<16x256xf32>
    %12 = vector.broadcast %8 : vector<1x256xf32> to vector<16x256xf32>
    %13 = arith.addf %11, %12 : vector<16x256xf32>
    %cst_12 = arith.constant 0.000000e+00 : f32
    %14 = vector.broadcast %cst_12 : f32 to vector<16x256xf32>
    %15 = arith.subf %14, %13 : vector<16x256xf32>
    %16 = math.exp %15 : vector<16x256xf32>
    %cst_13 = arith.constant 1.000000e+00 : f32
    %17 = vector.broadcast %cst_13 : f32 to vector<16x256xf32>
    %18 = arith.addf %17, %16 : vector<16x256xf32>
    %19 = tpu.reciprocal %18 {approx = true} : vector<16x256xf32> -> vector<16x256xf32>
    %20 = arith.truncf %19 : vector<16x256xf32> to vector<16x256xbf16>
    %21 = vector.extract_strided_slice %20 {offsets = [0, 0], sizes = [16, 128], strides = [1, 1]} : vector<16x256xbf16> to vector<16x128xbf16>
    %22 = arith.mulf %21, %10 : vector<16x128xbf16>
    %23 = vector.extract_strided_slice %20 {offsets = [0, 128], sizes = [16, 128], strides = [1, 1]} : vector<16x256xbf16> to vector<16x128xbf16>
    %24 = arith.mulf %23, %10 : vector<16x128xbf16>
    %25 = vector.extract_strided_slice %6 {offsets = [0, 128], sizes = [16, 128], strides = [1, 1]} : vector<16x512xbf16> to vector<16x128xbf16>
    %cst_14 = arith.constant dense<0.000000e+00> : vector<16x256xf32>
    %26 = tpu.matmul %25, %7, %cst_14 {dimension_numbers = #tpu.dot_dimension_numbers<[1], [0], [0], [1], [0, 0, 1, 1], [], []>} : vector<16x128xbf16>, vector<128x256xbf16>, vector<16x256xf32> -> vector<16x256xf32>
    %27 = vector.broadcast %8 : vector<1x256xf32> to vector<16x256xf32>
    %28 = arith.addf %26, %27 : vector<16x256xf32>
    %cst_15 = arith.constant 0.000000e+00 : f32
    %29 = vector.broadcast %cst_15 : f32 to vector<16x256xf32>
    %30 = arith.subf %29, %28 : vector<16x256xf32>
    %31 = math.exp %30 : vector<16x256xf32>
    %cst_16 = arith.constant 1.000000e+00 : f32
    %32 = vector.broadcast %cst_16 : f32 to vector<16x256xf32>
    %33 = arith.addf %32, %31 : vector<16x256xf32>
    %34 = tpu.reciprocal %33 {approx = true} : vector<16x256xf32> -> vector<16x256xf32>
    %35 = arith.truncf %34 : vector<16x256xf32> to vector<16x256xbf16>
    %36 = vector.extract_strided_slice %35 {offsets = [0, 0], sizes = [16, 128], strides = [1, 1]} : vector<16x256xbf16> to vector<16x128xbf16>
    %37 = arith.mulf %36, %25 : vector<16x128xbf16>
    %38 = vector.extract_strided_slice %35 {offsets = [0, 128], sizes = [16, 128], strides = [1, 1]} : vector<16x256xbf16> to vector<16x128xbf16>
    %39 = arith.mulf %38, %25 : vector<16x128xbf16>
    %40 = vector.extract_strided_slice %6 {offsets = [0, 256], sizes = [16, 128], strides = [1, 1]} : vector<16x512xbf16> to vector<16x128xbf16>
    %cst_17 = arith.constant dense<0.000000e+00> : vector<16x256xf32>
    %41 = tpu.matmul %40, %7, %cst_17 {dimension_numbers = #tpu.dot_dimension_numbers<[1], [0], [0], [1], [0, 0, 1, 1], [], []>} : vector<16x128xbf16>, vector<128x256xbf16>, vector<16x256xf32> -> vector<16x256xf32>
    %42 = vector.broadcast %8 : vector<1x256xf32> to vector<16x256xf32>
    %43 = arith.addf %41, %42 : vector<16x256xf32>
    %cst_18 = arith.constant 0.000000e+00 : f32
    %44 = vector.broadcast %cst_18 : f32 to vector<16x256xf32>
    %45 = arith.subf %44, %43 : vector<16x256xf32>
    %46 = math.exp %45 : vector<16x256xf32>
    %cst_19 = arith.constant 1.000000e+00 : f32
    %47 = vector.broadcast %cst_19 : f32 to vector<16x256xf32>
    %48 = arith.addf %47, %46 : vector<16x256xf32>
    %49 = tpu.reciprocal %48 {approx = true} : vector<16x256xf32> -> vector<16x256xf32>
    %50 = arith.truncf %49 : vector<16x256xf32> to vector<16x256xbf16>
    %51 = vector.extract_strided_slice %50 {offsets = [0, 0], sizes = [16, 128], strides = [1, 1]} : vector<16x256xbf16> to vector<16x128xbf16>
    %52 = arith.mulf %51, %40 : vector<16x128xbf16>
    %53 = vector.extract_strided_slice %50 {offsets = [0, 128], sizes = [16, 128], strides = [1, 1]} : vector<16x256xbf16> to vector<16x128xbf16>
    %54 = arith.mulf %53, %40 : vector<16x128xbf16>
    %55 = vector.extract_strided_slice %6 {offsets = [0, 384], sizes = [16, 128], strides = [1, 1]} : vector<16x512xbf16> to vector<16x128xbf16>
    %cst_20 = arith.constant dense<0.000000e+00> : vector<16x256xf32>
    %56 = tpu.matmul %55, %7, %cst_20 {dimension_numbers = #tpu.dot_dimension_numbers<[1], [0], [0], [1], [0, 0, 1, 1], [], []>} : vector<16x128xbf16>, vector<128x256xbf16>, vector<16x256xf32> -> vector<16x256xf32>
    %57 = vector.broadcast %8 : vector<1x256xf32> to vector<16x256xf32>
    %58 = arith.addf %56, %57 : vector<16x256xf32>
    %cst_21 = arith.constant 0.000000e+00 : f32
    %59 = vector.broadcast %cst_21 : f32 to vector<16x256xf32>
    %60 = arith.subf %59, %58 : vector<16x256xf32>
    %61 = math.exp %60 : vector<16x256xf32>
    %cst_22 = arith.constant 1.000000e+00 : f32
    %62 = vector.broadcast %cst_22 : f32 to vector<16x256xf32>
    %63 = arith.addf %62, %61 : vector<16x256xf32>
    %64 = tpu.reciprocal %63 {approx = true} : vector<16x256xf32> -> vector<16x256xf32>
    %65 = arith.truncf %64 : vector<16x256xf32> to vector<16x256xbf16>
    %66 = vector.extract_strided_slice %65 {offsets = [0, 0], sizes = [16, 128], strides = [1, 1]} : vector<16x256xbf16> to vector<16x128xbf16>
    %67 = arith.mulf %66, %55 : vector<16x128xbf16>
    %68 = vector.extract_strided_slice %65 {offsets = [0, 128], sizes = [16, 128], strides = [1, 1]} : vector<16x256xbf16> to vector<16x128xbf16>
    %69 = arith.mulf %68, %55 : vector<16x128xbf16>
    %70 = tpu.concatenate %22, %37, %52, %67 in 1 : vector<16x128xbf16>, vector<16x128xbf16>, vector<16x128xbf16>, vector<16x128xbf16> -> vector<16x512xbf16>
    %cst_23 = arith.constant dense<0.000000e+00> : vector<16x128xf32>
    %71 = tpu.matmul %70, %9, %cst_23 {dimension_numbers = #tpu.dot_dimension_numbers<[1], [0], [0], [1], [0, 0, 1, 1], [], []>} : vector<16x512xbf16>, vector<512x128xbf16>, vector<16x128xf32> -> vector<16x128xf32>
    %c0_24 = arith.constant 0 : index
    %c0_25 = arith.constant 0 : index
    %c0_26 = arith.constant 0 : index
    %c0_27 = arith.constant 0 : index
    %72 = vector.load %arg7[%c0_24, %c0_25, %c0_26, %c0_27] : memref<1x2x16x128xf32, #tpu.memory_space<vmem>>, vector<1x1x16x128xf32>
    %73 = vector.shape_cast %72 : vector<1x1x16x128xf32> to vector<16x128xf32>
    %74 = vector.shape_cast %71 : vector<16x128xf32> to vector<1x1x16x128xf32>
    tpu.vector_store %arg7[%c0_24, %c0_25, %c0_26, %c0_27], %74 {strides = array<i32>} : memref<1x2x16x128xf32, #tpu.memory_space<vmem>>, vector<1x1x16x128xf32>,
    %75 = tpu.concatenate %24, %39, %54, %69 in 1 : vector<16x128xbf16>, vector<16x128xbf16>, vector<16x128xbf16>, vector<16x128xbf16> -> vector<16x512xbf16>
    %cst_28 = arith.constant dense<0.000000e+00> : vector<16x128xf32>
    %76 = tpu.matmul %75, %9, %cst_28 {dimension_numbers = #tpu.dot_dimension_numbers<[1], [0], [0], [1], [0, 0, 1, 1], [], []>} : vector<16x512xbf16>, vector<512x128xbf16>, vector<16x128xf32> -> vector<16x128xf32>
    %c0_29 = arith.constant 0 : index
    %c1 = arith.constant 1 : index
    %c0_30 = arith.constant 0 : index
    %c0_31 = arith.constant 0 : index
    %77 = vector.load %arg7[%c0_29, %c1, %c0_30, %c0_31] : memref<1x2x16x128xf32, #tpu.memory_space<vmem>>, vector<1x1x16x128xf32>
    %78 = vector.shape_cast %77 : vector<1x1x16x128xf32> to vector<16x128xf32>
    %79 = vector.shape_cast %76 : vector<16x128xf32> to vector<1x1x16x128xf32>
    tpu.vector_store %arg7[%c0_29, %c1, %c0_30, %c0_31], %79 {strides = array<i32>} : memref<1x2x16x128xf32, #tpu.memory_space<vmem>>, vector<1x1x16x128xf32>,
    return
  }
  func.func @transform_0(%arg0: i32, %arg1: i32) -> (i32, i32, i32) {
    %c0_i32 = arith.constant 0 : i32
    %c0_i32_0 = arith.constant 0 : i32
    return %arg0, %arg1, %c0_i32 : i32, i32, i32
  }
  func.func @transform_1(%arg0: i32, %arg1: i32) -> (i32, i32) {
    %c0_i32 = arith.constant 0 : i32
    %c0_i32_0 = arith.constant 0 : i32
    %c0_i32_1 = arith.constant 0 : i32
    return %c0_i32, %c0_i32_0 : i32, i32
  }
  func.func @transform_2(%arg0: i32, %arg1: i32) -> (i32, i32) {
    %c0_i32 = arith.constant 0 : i32
    %c0_i32_0 = arith.constant 0 : i32
    %c0_i32_1 = arith.constant 0 : i32
    return %c0_i32, %c0_i32_0 : i32, i32
  }
  func.func @transform_3(%arg0: i32, %arg1: i32) -> (i32, i32) {
    %c0_i32 = arith.constant 0 : i32
    %c0_i32_0 = arith.constant 0 : i32
    %c0_i32_1 = arith.constant 0 : i32
    return %c0_i32, %c0_i32_0 : i32, i32
  }
  func.func @transform_4(%arg0: i32, %arg1: i32) -> (i32, i32) {
    %c0_i32 = arith.constant 0 : i32
    %c0_i32_0 = arith.constant 0 : i32
    %c0_i32_1 = arith.constant 0 : i32
    return %c0_i32, %c0_i32_0 : i32, i32
  }
  func.func @transform_5(%arg0: i32, %arg1: i32) -> (i32, i32, i32, i32) {
    %c0_i32 = arith.constant 0 : i32
    %c0_i32_0 = arith.constant 0 : i32
    %c0_i32_1 = arith.constant 0 : i32
    return %arg0, %c0_i32, %arg1, %c0_i32_0 : i32, i32, i32, i32
  }
}

</mosaic_0001>

<llo_original>
// kernel: encoder_masker_decoder.1
$region0: #{encoder_masker_decoder.1}
  #allocation0 [shape = 'u32[]', space=smem, size = 0x4, offset = 0x4, fixed_abs, tag = 'smem constant byte address 0x4 - core index']
  #allocation1 [shape = 'u32[72,128]{1,0:T(1,128)}', space=vmem, size = 0x9000, scoped, tag = 'internal scratch']
  %s0 = inlined_call_operand.vmem [shape: bf16[2,32,128], index: 0, kind: input, shape index: {}]
  %s1 = inlined_call_operand.vmem [shape: bf16[128,512], index: 1, kind: input, shape index: {}]
  %s2 = inlined_call_operand.vmem [shape: bf16[128,256], index: 2, kind: input, shape index: {}]
  %s3 = inlined_call_operand.vmem [shape: f32[1,256], index: 3, kind: input, shape index: {}]
  %s4 = inlined_call_operand.vmem [shape: bf16[512,128], index: 4, kind: input, shape index: {}]
  %s5 = inlined_call_operand.vmem [shape: f32[2,2,32,128], index: 5, kind: output, shape index: {}]
  %s6 = sld [smem:[#allocation0]]
  $region87: #{encoder_masker_decoder.1} parent=0
    _
  %s8 = ssub.s32 1, %s6
  %s9 = scalar_select 0, %s8, %s6
  $region1: #{encoder_masker_decoder.1} parent=0
    #allocation2 [shape = 'u8[32768]{0}', space=vmem, size = 0x8000, scoped, tag = 'output window, operand 0']
    loop: start=0, step=1, limit=6
    $region2: #{encoder_masker_decoder.1} parent=1 // loop_pre_header
      _
    $region3: #{encoder_masker_decoder.1} parent=1 // loop_header
      %s11 = sphi 0, %s15
      %p12 = scmp.ge.s32.totalorder %s11, 6
      %s18 = sphi 0, %s30
      %s19 = sphi 0, %s26
      %s20 = sphi 0, %s18
      %s21 = sphi 0, %s19
      %s22 = sphi 0, %s20
      %s23 = sphi 0, %s21
      %s35 = sphi 0, %s37
      %s38 = sphi 0, %s35
      %s39 = sphi 0, %s38
      %s55 = sphi 0, %s39
      %s59 = sphi 0, %s59
      %s61 = sphi 0, %s59
      %s62 = sphi 0, %s61
      %s76 = sphi 0, %s62
      %s80 = sphi 0, %s80
      %s82 = sphi 0, %s80
      %s83 = sphi 0, %s82
      %s97 = sphi 0, %s83
      %s101 = sphi 0, %s101
      %s103 = sphi 0, %s101
      %s104 = sphi 0, %s103
      %s118 = sphi 0, %s104
      %s122 = sphi 0, %s122
      %s124 = sphi 0, %s122
      %s125 = sphi 0, %s124
      %s139 = sphi 0, %s125
      %s147 = sphi 0, %s149
      %s150 = sphi 0, %s147
      %s151 = sphi 0, %s150
      %s167 = sphi 0, %s151
    $region4: #{encoder_masker_decoder.1} parent=1 // loop_header_branch
      %14 = sbr.rel (%p12) target = $region8
    $region5: #{encoder_masker_decoder.1} parent=1 // loop_body
      %s16 = ssub.s32 %s11, 1
      %s17 = ssub.s32 %s11, 2
      %s24 = sadd.s32 1, %s19
      %p25 = scmp.ge.s32.totalorder %s24, 2
      %s26 = scalar_select %p25, 0, %s24
      %s27 = sadd.s32 1, %s18
      %s28 = scalar_select %p25, %s27, %s18
      %p29 = scmp.ge.s32.totalorder %s28, 2
      %s30 = scalar_select %p29, 0, %s28
      %s31 = ssub.s32 %s18, %s30
      %s32 = ssub.s32 %s19, %s26
      %s33 = sor.u32 %s31, %s32
      %p34 = scmp.eq.s32.totalorder %s33, 0
      %s36 = sadd.s32 %s35, 1
      %s37 = scalar_select %p34, %s35, %s36
      %p40 = pneg %p34
      %p41 = scmp.eq.s32.totalorder %s11, 3
      %p42 = por %p40, %p41
      %p43 = scmp.ne.s32.totalorder %s35, %s38
      %p44 = scmp.eq.s32.totalorder %s11, 0
      %p45 = por %p43, %p44
      %p46 = scmp.ne.s32.totalorder %s35, %s38
      %p47 = scmp.eq.s32.totalorder %s16, 3
      %p48 = por %p46, %p47
      %p49 = scmp.ne.s32.totalorder %s38, %s39
      %p50 = scmp.eq.s32.totalorder %s16, 0
      %p51 = por %p49, %p50
      %p52 = scmp.ne.s32.totalorder %s38, %s39
      %p53 = scmp.eq.s32.totalorder %s17, 3
      %p54 = por %p52, %p53
      %p56 = scmp.ne.s32.totalorder %s39, %s55
      %p57 = scmp.eq.s32.totalorder %s17, 0
      %p58 = por %p56, %p57
      %s60 = sadd.s32 %s59, 1
      %p63 = scmp.eq.s32.totalorder %s11, 3
      %p64 = scmp.ne.s32.totalorder %s59, %s61
      %p65 = scmp.eq.s32.totalorder %s11, 0
      %p66 = por %p64, %p65
      %p67 = scmp.ne.s32.totalorder %s59, %s61
      %p68 = scmp.eq.s32.totalorder %s16, 3
      %p69 = por %p67, %p68
      %p70 = scmp.ne.s32.totalorder %s61, %s62
      %p71 = scmp.eq.s32.totalorder %s16, 0
      %p72 = por %p70, %p71
      %p73 = scmp.ne.s32.totalorder %s61, %s62
      %p74 = scmp.eq.s32.totalorder %s17, 3
      %p75 = por %p73, %p74
      %p77 = scmp.ne.s32.totalorder %s62, %s76
      %p78 = scmp.eq.s32.totalorder %s17, 0
      %p79 = por %p77, %p78
      %s81 = sadd.s32 %s80, 1
      %p84 = scmp.eq.s32.totalorder %s11, 3
      %p85 = scmp.ne.s32.totalorder %s80, %s82
      %p86 = scmp.eq.s32.totalorder %s11, 0
      %p87 = por %p85, %p86
      %p88 = scmp.ne.s32.totalorder %s80, %s82
      %p89 = scmp.eq.s32.totalorder %s16, 3
      %p90 = por %p88, %p89
      %p91 = scmp.ne.s32.totalorder %s82, %s83
      %p92 = scmp.eq.s32.totalorder %s16, 0
      %p93 = por %p91, %p92
      %p94 = scmp.ne.s32.totalorder %s82, %s83
      %p95 = scmp.eq.s32.totalorder %s17, 3
      %p96 = por %p94, %p95
      %p98 = scmp.ne.s32.totalorder %s83, %s97
      %p99 = scmp.eq.s32.totalorder %s17, 0
      %p100 = por %p98, %p99
      %s102 = sadd.s32 %s101, 1
      %p105 = scmp.eq.s32.totalorder %s11, 3
      %p106 = scmp.ne.s32.totalorder %s101, %s103
      %p107 = scmp.eq.s32.totalorder %s11, 0
      %p108 = por %p106, %p107
      %p109 = scmp.ne.s32.totalorder %s101, %s103
      %p110 = scmp.eq.s32.totalorder %s16, 3
      %p111 = por %p109, %p110
      %p112 = scmp.ne.s32.totalorder %s103, %s104
      %p113 = scmp.eq.s32.totalorder %s16, 0
      %p114 = por %p112, %p113
      %p115 = scmp.ne.s32.totalorder %s103, %s104
      %p116 = scmp.eq.s32.totalorder %s17, 3
      %p117 = por %p115, %p116
      %p119 = scmp.ne.s32.totalorder %s104, %s118
      %p120 = scmp.eq.s32.totalorder %s17, 0
      %p121 = por %p119, %p120
      %s123 = sadd.s32 %s122, 1
      %p126 = scmp.eq.s32.totalorder %s11, 3
      %p127 = scmp.ne.s32.totalorder %s122, %s124
      %p128 = scmp.eq.s32.totalorder %s11, 0
      %p129 = por %p127, %p128
      %p130 = scmp.ne.s32.totalorder %s122, %s124
      %p131 = scmp.eq.s32.totalorder %s16, 3
      %p132 = por %p130, %p131
      %p133 = scmp.ne.s32.totalorder %s124, %s125
      %p134 = scmp.eq.s32.totalorder %s16, 0
      %p135 = por %p133, %p134
      %p136 = scmp.ne.s32.totalorder %s124, %s125
      %p137 = scmp.eq.s32.totalorder %s17, 3
      %p138 = por %p136, %p137
      %p140 = scmp.ne.s32.totalorder %s125, %s139
      %p141 = scmp.eq.s32.totalorder %s17, 0
      %p142 = por %p140, %p141
      %s143 = ssub.s32 %s18, %s30
      %s144 = ssub.s32 %s19, %s26
      %s145 = sor.u32 %s143, %s144
      %p146 = scmp.eq.s32.totalorder %s145, 0
      %s148 = sadd.s32 %s147, 1
      %s149 = scalar_select %p146, %s147, %s148
      %p152 = pneg %p146
      %p153 = scmp.eq.s32.totalorder %s11, 3
      %p154 = por %p152, %p153
      %p155 = scmp.ne.s32.totalorder %s147, %s150
      %p156 = scmp.eq.s32.totalorder %s11, 0
      %p157 = por %p155, %p156
      %p158 = scmp.ne.s32.totalorder %s147, %s150
      %p159 = scmp.eq.s32.totalorder %s16, 3
      %p160 = por %p158, %p159
      %p161 = scmp.ne.s32.totalorder %s150, %s151
      %p162 = scmp.eq.s32.totalorder %s16, 0
      %p163 = por %p161, %p162
      %p164 = scmp.ne.s32.totalorder %s150, %s151
      %p165 = scmp.eq.s32.totalorder %s17, 3
      %p166 = por %p164, %p165
      %p168 = scmp.ne.s32.totalorder %s151, %s167
      %p169 = scmp.eq.s32.totalorder %s17, 0
      %p170 = por %p168, %p169
      %p171 = scmp.le.s32.totalorder 1, %s11
      %p172 = scmp.lt.s32.totalorder %s11, 5
      %p173 = pnand %p171, %p172
      %p174 = pneg %p173
      // Predicated region
      $region9: #{encoder_masker_decoder.1} parent=5 // pred_check
        _
      $region10: #{encoder_masker_decoder.1} parent=5 // pred_check_branch
        %176 = sbr.rel (%p173) target = $region12
      $region11: #{encoder_masker_decoder.1} parent=5 // pred_region
        %s177 = ssub.s32 %s11, 1
        // Predicated region
        $region13: #{encoder_masker_decoder.1} parent=11 // pred_check
          %p178 = pneg %p72
        $region14: #{encoder_masker_decoder.1} parent=11 // pred_check_branch
          %180 = sbr.rel (%p178) target = $region16
        $region15: #{encoder_masker_decoder.1} parent=11 // pred_region
          _
        $region16: #{encoder_masker_decoder.1} parent=11 // pred_fallthru
          _
        // Predicated region
        $region17: #{encoder_masker_decoder.1} parent=11 // pred_check
          %p181 = pneg %p93
        $region18: #{encoder_masker_decoder.1} parent=11 // pred_check_branch
          %183 = sbr.rel (%p181) target = $region20
        $region19: #{encoder_masker_decoder.1} parent=11 // pred_region
          _
        $region20: #{encoder_masker_decoder.1} parent=11 // pred_fallthru
          _
        // Predicated region
        $region21: #{encoder_masker_decoder.1} parent=11 // pred_check
          %p184 = pneg %p114
        $region22: #{encoder_masker_decoder.1} parent=11 // pred_check_branch
          %186 = sbr.rel (%p184) target = $region24
        $region23: #{encoder_masker_decoder.1} parent=11 // pred_region
          _
        $region24: #{encoder_masker_decoder.1} parent=11 // pred_fallthru
          _
        // Predicated region
        $region25: #{encoder_masker_decoder.1} parent=11 // pred_check
          %p187 = pneg %p135
        $region26: #{encoder_masker_decoder.1} parent=11 // pred_check_branch
          %189 = sbr.rel (%p187) target = $region28
        $region27: #{encoder_masker_decoder.1} parent=11 // pred_region
          _
        $region28: #{encoder_masker_decoder.1} parent=11 // pred_fallthru
          _
      $region12: #{encoder_masker_decoder.1} parent=5 // pred_fallthru
        _
      %p190 = scmp.lt.s32.totalorder %s11, 4
      // Predicated region
      $region29: #{encoder_masker_decoder.1} parent=5 // pred_check
        %p191 = pneg %p190
      $region30: #{encoder_masker_decoder.1} parent=5 // pred_check_branch
        %193 = sbr.rel (%p191) target = $region32
      $region31: #{encoder_masker_decoder.1} parent=5 // pred_region
        // Predicated region
        $region33: #{encoder_masker_decoder.1} parent=31 // pred_check
          %p194 = pneg %p45
        $region34: #{encoder_masker_decoder.1} parent=31 // pred_check_branch
          %196 = sbr.rel (%p194) target = $region36
        $region35: #{encoder_masker_decoder.1} parent=31 // pred_region
          %s197 = smul.u32 2, %s19
          %p198 = scmp.lt.s32.totalorder %s18, 1
          %s199 = scalar_select %p198, %s18, 1
          %p200 = scmp.lt.s32.totalorder %s197, 3
          %s201 = scalar_select %p200, %s197, 3
          %s202 = smul.addr %s199, 4
          %s203 = sadd.s32 %s201, %s202
          %s204 = smul.addr %s203, 4
          %s205 = scalar_lea.vmem %s0, %s204
          %s206 = smul.u32 2, %s19
        $region36: #{encoder_masker_decoder.1} parent=31 // pred_fallthru
          _
      $region32: #{encoder_masker_decoder.1} parent=5 // pred_fallthru
        _
      %p207 = scmp.le.s32.totalorder 1, %s11
      %p208 = scmp.lt.s32.totalorder %s11, 5
      %p209 = pnand %p207, %p208
      %p210 = pneg %p209
      // Predicated region
      $region37: #{encoder_masker_decoder.1} parent=5 // pred_check
        _
      $region38: #{encoder_masker_decoder.1} parent=5 // pred_check_branch
        %212 = sbr.rel (%p209) target = $region40
      $region39: #{encoder_masker_decoder.1} parent=5 // pred_region
        %s213 = ssub.s32 %s11, 1
        %s214 = smul.u32 2, %s21
        %p215 = scmp.lt.s32.totalorder %s20, 1
        %s216 = scalar_select %p215, %s20, 1
        %p217 = scmp.lt.s32.totalorder %s214, 3
        %s218 = scalar_select %p217, %s214, 3
        %s219 = smul.addr %s216, 4
        %s220 = sadd.s32 %s218, %s219
        %s221 = smul.addr %s220, 4
        %s222 = scalar_lea.vmem %s0, %s221
        %p223 = pneg %p51
        %p224 = pneg %p48
        %p225 = pneg %p72
        %p226 = pneg %p69
        %p227 = pneg %p93
        %p228 = pneg %p90
        %p229 = pneg %p114
        %p230 = pneg %p111
        %p231 = pneg %p135
        %p232 = pneg %p132
        %p233 = pneg %p163
        %p234 = pneg %p160
        %s235 = sand.u32 %s150, 1
        %s236 = sand.u32 %s150, 1
        %s237 = smul.addr %s236, 32
        %s238 = scalar_lea.vmem [#allocation2], %s237
        %s239 = smul.u32 2, %s21
        %p240 = scmp.lt.s32.totalorder %s20, 1
        %s241 = scalar_select %p240, %s20, 1
        %p242 = scmp.lt.s32.totalorder %s239, 3
        %s243 = scalar_select %p242, %s239, 3
        %s244 = smul.addr %s241, 4
        %s245 = sadd.s32 %s243, %s244
        %s246 = smul.addr %s245, 4
        %s247 = scalar_lea.vmem %s0, %s246
        %s248 = smul.u32 2, %s21
        %s249 = smul.u32 2, %s21
        %v250 = vld [vmem:[%s247] sm:$0xf]
        %v251 = vld [vmem:[%s247 + $0x4] sm:$0xf]
        %v252 = vld [vmem:[%s1] sm:$0xff]
        %v253 = vld [vmem:[%s1 + $0x8] sm:$0xff]
        %v254 = vld [vmem:[%s1 + $0x10] sm:$0xff]
        %v255 = vld [vmem:[%s1 + $0x18] sm:$0xff]
        %v256 = vld [vmem:[%s1 + $0x20] sm:$0xff]
        %v257 = vld [vmem:[%s1 + $0x28] sm:$0xff]
        %v258 = vld [vmem:[%s1 + $0x30] sm:$0xff]
        %v259 = vld [vmem:[%s1 + $0x38] sm:$0xff]
        %v260 = vld [vmem:[%s1 + $0x40] sm:$0xff]
        %v261 = vld [vmem:[%s1 + $0x48] sm:$0xff]
        %v262 = vld [vmem:[%s1 + $0x50] sm:$0xff]
        %v263 = vld [vmem:[%s1 + $0x58] sm:$0xff]
        %v264 = vld [vmem:[%s1 + $0x60] sm:$0xff]
        %v265 = vld [vmem:[%s1 + $0x68] sm:$0xff]
        %v266 = vld [vmem:[%s1 + $0x70] sm:$0xff]
        %v267 = vld [vmem:[%s1 + $0x78] sm:$0xff]
        %v268 = vld [vmem:[%s1 + $0x80] sm:$0xff]
        %v269 = vld [vmem:[%s1 + $0x88] sm:$0xff]
        %v270 = vld [vmem:[%s1 + $0x90] sm:$0xff]
        %v271 = vld [vmem:[%s1 + $0x98] sm:$0xff]
        %v272 = vld [vmem:[%s1 + $0xa0] sm:$0xff]
        %v273 = vld [vmem:[%s1 + $0xa8] sm:$0xff]
        %v274 = vld [vmem:[%s1 + $0xb0] sm:$0xff]
        %v275 = vld [vmem:[%s1 + $0xb8] sm:$0xff]
        %v276 = vld [vmem:[%s1 + $0xc0] sm:$0xff]
        %v277 = vld [vmem:[%s1 + $0xc8] sm:$0xff]
        %v278 = vld [vmem:[%s1 + $0xd0] sm:$0xff]
        %v279 = vld [vmem:[%s1 + $0xd8] sm:$0xff]
        %v280 = vld [vmem:[%s1 + $0xe0] sm:$0xff]
        %v281 = vld [vmem:[%s1 + $0xe8] sm:$0xff]
        %v282 = vld [vmem:[%s1 + $0xf0] sm:$0xff]
        %v283 = vld [vmem:[%s1 + $0xf8] sm:$0xff]
        %v286 = vunpack.c.l.b16 %v250
        %v287 = vunpack.c.l.b16 %v251
        %v288 = vpack.c.b16 %v287, %v286
        %v322 = vunpack.c.l.b16 %v252
        %v323 = vunpack.c.h.b16 %v252
        %v324 = vunpack.c.l.b16 %v253
        %v325 = vunpack.c.h.b16 %v253
        %v326 = vunpack.c.l.b16 %v254
        %v327 = vunpack.c.h.b16 %v254
        %v328 = vunpack.c.l.b16 %v255
        %v329 = vunpack.c.h.b16 %v255
        %v330 = vunpack.c.l.b16 %v256
        %v331 = vunpack.c.h.b16 %v256
        %v332 = vunpack.c.l.b16 %v257
        %v333 = vunpack.c.h.b16 %v257
        %v334 = vunpack.c.l.b16 %v258
        %v335 = vunpack.c.h.b16 %v258
        %v336 = vunpack.c.l.b16 %v259
        %v337 = vunpack.c.h.b16 %v259
        %v338 = vunpack.c.l.b16 %v260
        %v339 = vunpack.c.h.b16 %v260
        %v340 = vunpack.c.l.b16 %v261
        %v341 = vunpack.c.h.b16 %v261
        %v342 = vunpack.c.l.b16 %v262
        %v343 = vunpack.c.h.b16 %v262
        %v344 = vunpack.c.l.b16 %v263
        %v345 = vunpack.c.h.b16 %v263
        %v346 = vunpack.c.l.b16 %v264
        %v347 = vunpack.c.h.b16 %v264
        %v348 = vunpack.c.l.b16 %v265
        %v349 = vunpack.c.h.b16 %v265
        %v350 = vunpack.c.l.b16 %v266
        %v351 = vunpack.c.h.b16 %v266
        %v352 = vunpack.c.l.b16 %v267
        %v353 = vunpack.c.h.b16 %v267
        %v354 = vunpack.c.l.b16 %v268
        %v355 = vunpack.c.h.b16 %v268
        %v356 = vunpack.c.l.b16 %v269
        %v357 = vunpack.c.h.b16 %v269
        %v358 = vunpack.c.l.b16 %v270
        %v359 = vunpack.c.h.b16 %v270
        %v360 = vunpack.c.l.b16 %v271
        %v361 = vunpack.c.h.b16 %v271
        %v362 = vunpack.c.l.b16 %v272
        %v363 = vunpack.c.h.b16 %v272
        %v364 = vunpack.c.l.b16 %v273
        %v365 = vunpack.c.h.b16 %v273
        %v366 = vunpack.c.l.b16 %v274
        %v367 = vunpack.c.h.b16 %v274
        %v368 = vunpack.c.l.b16 %v275
        %v369 = vunpack.c.h.b16 %v275
        %v370 = vunpack.c.l.b16 %v276
        %v371 = vunpack.c.h.b16 %v276
        %v372 = vunpack.c.l.b16 %v277
        %v373 = vunpack.c.h.b16 %v277
        %v374 = vunpack.c.l.b16 %v278
        %v375 = vunpack.c.h.b16 %v278
        %v376 = vunpack.c.l.b16 %v279
        %v377 = vunpack.c.h.b16 %v279
        %v378 = vunpack.c.l.b16 %v280
        %v379 = vunpack.c.h.b16 %v280
        %v380 = vunpack.c.l.b16 %v281
        %v381 = vunpack.c.h.b16 %v281
        %v382 = vunpack.c.l.b16 %v282
        %v383 = vunpack.c.h.b16 %v282
        %v384 = vunpack.c.l.b16 %v283
        %v385 = vunpack.c.h.b16 %v283
        %v386 = vpack.c.b16 %v326, %v322
        %v387 = vpack.c.b16 %v327, %v323
        %v388 = vpack.c.b16 %v328, %v324
        %v389 = vpack.c.b16 %v329, %v325
        %v390 = vpack.c.b16 %v334, %v330
        %v391 = vpack.c.b16 %v335, %v331
        %v392 = vpack.c.b16 %v336, %v332
        %v393 = vpack.c.b16 %v337, %v333
        %v394 = vpack.c.b16 %v342, %v338
        %v395 = vpack.c.b16 %v343, %v339
        %v396 = vpack.c.b16 %v344, %v340
        %v397 = vpack.c.b16 %v345, %v341
        %v398 = vpack.c.b16 %v350, %v346
        %v399 = vpack.c.b16 %v351, %v347
        %v400 = vpack.c.b16 %v352, %v348
        %v401 = vpack.c.b16 %v353, %v349
        %v402 = vpack.c.b16 %v358, %v354
        %v403 = vpack.c.b16 %v359, %v355
        %v404 = vpack.c.b16 %v360, %v356
        %v405 = vpack.c.b16 %v361, %v357
        %v406 = vpack.c.b16 %v366, %v362
        %v407 = vpack.c.b16 %v367, %v363
        %v408 = vpack.c.b16 %v368, %v364
        %v409 = vpack.c.b16 %v369, %v365
        %v410 = vpack.c.b16 %v374, %v370
        %v411 = vpack.c.b16 %v375, %v371
        %v412 = vpack.c.b16 %v376, %v372
        %v413 = vpack.c.b16 %v377, %v373
        %v414 = vpack.c.b16 %v382, %v378
        %v415 = vpack.c.b16 %v383, %v379
        %v416 = vpack.c.b16 %v384, %v380
        %v417 = vpack.c.b16 %v385, %v381
        %450 = vmatpush.bf16.msra.mxu0 %v414
        %451 = vmatpush.bf16.msra.mxu0 %v410
        %452 = vmatpush.bf16.msra.mxu0 %v406
        %453 = vmatpush.bf16.msra.mxu0 %v402
        %454 = vmatpush.bf16.msra.mxu0 %v398
        %455 = vmatpush.bf16.msra.mxu0 %v394
        %456 = vmatpush.bf16.msra.mxu0 %v390
        %457 = vmatpush.bf16.msra.mxu0 %v386
        %458 = vmatmul.bf16.gmra.mxu0 %v288
        %v459 = vpop.f32.mrf.mxu0
        %v460 = vadd.f32 0.0, %v459
        %v461 = vpop.f32.mrf.mxu0
        %v462 = vadd.f32 0.0, %v461
        %463 = vdwg.mxu0
        %464 = vmatpush.bf16.msra.mxu0 %v415
        %465 = vmatpush.bf16.msra.mxu0 %v411
        %466 = vmatpush.bf16.msra.mxu0 %v407
        %467 = vmatpush.bf16.msra.mxu0 %v403
        %468 = vmatpush.bf16.msra.mxu0 %v399
        %469 = vmatpush.bf16.msra.mxu0 %v395
        %470 = vmatpush.bf16.msra.mxu0 %v391
        %471 = vmatpush.bf16.msra.mxu0 %v387
        %472 = vmatmul.bf16.gmra.mxu0 %v288
        %v473 = vpop.f32.mrf.mxu0
        %v474 = vadd.f32 0.0, %v473
        %v475 = vpop.f32.mrf.mxu0
        %v476 = vadd.f32 0.0, %v475
        %477 = vdwg.mxu0
        %478 = vmatpush.bf16.msra.mxu0 %v416
        %479 = vmatpush.bf16.msra.mxu0 %v412
        %480 = vmatpush.bf16.msra.mxu0 %v408
        %481 = vmatpush.bf16.msra.mxu0 %v404
        %482 = vmatpush.bf16.msra.mxu0 %v400
        %483 = vmatpush.bf16.msra.mxu0 %v396
        %484 = vmatpush.bf16.msra.mxu0 %v392
        %485 = vmatpush.bf16.msra.mxu0 %v388
        %486 = vmatmul.bf16.gmra.mxu0 %v288
        %v487 = vpop.f32.mrf.mxu0
        %v488 = vadd.f32 0.0, %v487
        %v489 = vpop.f32.mrf.mxu0
        %v490 = vadd.f32 0.0, %v489
        %491 = vdwg.mxu0
        %492 = vmatpush.bf16.msra.mxu0 %v417
        %493 = vmatpush.bf16.msra.mxu0 %v413
        %494 = vmatpush.bf16.msra.mxu0 %v409
        %495 = vmatpush.bf16.msra.mxu0 %v405
        %496 = vmatpush.bf16.msra.mxu0 %v401
        %497 = vmatpush.bf16.msra.mxu0 %v397
        %498 = vmatpush.bf16.msra.mxu0 %v393
        %499 = vmatpush.bf16.msra.mxu0 %v389
        %500 = vmatmul.bf16.gmra.mxu0 %v288
        %v501 = vpop.f32.mrf.mxu0
        %v502 = vadd.f32 0.0, %v501
        %v503 = vpop.f32.mrf.mxu0
        %v504 = vadd.f32 0.0, %v503
        %505 = vdwg.mxu0
        %v506 = vmax.f32 %v460, 0.0
        %v507 = vmax.f32 %v474, 0.0
        %v508 = vmax.f32 %v488, 0.0
        %v509 = vmax.f32 %v502, 0.0
        %v510 = vmax.f32 %v462, 0.0
        %v511 = vmax.f32 %v476, 0.0
        %v512 = vmax.f32 %v490, 0.0
        %v513 = vmax.f32 %v504, 0.0
        %v514 = vpack.c.bf16 %v507, %v506
        %v515 = vpack.c.bf16 %v509, %v508
        %v516 = vpack.c.bf16 %v511, %v510
        %v517 = vpack.c.bf16 %v513, %v512
        %v518 = vld [vmem:[%s2] sm:$0xff]
        %v519 = vld [vmem:[%s2 + $0x8] sm:$0xff]
        %v520 = vld [vmem:[%s2 + $0x10] sm:$0xff]
        %v521 = vld [vmem:[%s2 + $0x18] sm:$0xff]
        %v522 = vld [vmem:[%s2 + $0x20] sm:$0xff]
        %v523 = vld [vmem:[%s2 + $0x28] sm:$0xff]
        %v524 = vld [vmem:[%s2 + $0x30] sm:$0xff]
        %v525 = vld [vmem:[%s2 + $0x38] sm:$0xff]
        %v526 = vld [vmem:[%s2 + $0x40] sm:$0xff]
        %v527 = vld [vmem:[%s2 + $0x48] sm:$0xff]
        %v528 = vld [vmem:[%s2 + $0x50] sm:$0xff]
        %v529 = vld [vmem:[%s2 + $0x58] sm:$0xff]
        %v530 = vld [vmem:[%s2 + $0x60] sm:$0xff]
        %v531 = vld [vmem:[%s2 + $0x68] sm:$0xff]
        %v532 = vld [vmem:[%s2 + $0x70] sm:$0xff]
        %v533 = vld [vmem:[%s2 + $0x78] sm:$0xff]
        %v534 = vld [vmem:[%s3] sm:$0x3]
        %v535 = vld [vmem:[%s4] sm:$0xf]
        %v536 = vld [vmem:[%s4 + $0x4] sm:$0xf]
        %v537 = vld [vmem:[%s4 + $0x8] sm:$0xf]
        %v538 = vld [vmem:[%s4 + $0xc] sm:$0xf]
        %v539 = vld [vmem:[%s4 + $0x10] sm:$0xf]
        %v540 = vld [vmem:[%s4 + $0x14] sm:$0xf]
        %v541 = vld [vmem:[%s4 + $0x18] sm:$0xf]
        %v542 = vld [vmem:[%s4 + $0x1c] sm:$0xf]
        %v543 = vld [vmem:[%s4 + $0x20] sm:$0xf]
        %v544 = vld [vmem:[%s4 + $0x24] sm:$0xf]
        %v545 = vld [vmem:[%s4 + $0x28] sm:$0xf]
        %v546 = vld [vmem:[%s4 + $0x2c] sm:$0xf]
        %v547 = vld [vmem:[%s4 + $0x30] sm:$0xf]
        %v548 = vld [vmem:[%s4 + $0x34] sm:$0xf]
        %v549 = vld [vmem:[%s4 + $0x38] sm:$0xf]
        %v550 = vld [vmem:[%s4 + $0x3c] sm:$0xf]
        %v551 = vld [vmem:[%s4 + $0x40] sm:$0xf]
        %v552 = vld [vmem:[%s4 + $0x44] sm:$0xf]
        %v553 = vld [vmem:[%s4 + $0x48] sm:$0xf]
        %v554 = vld [vmem:[%s4 + $0x4c] sm:$0xf]
        %v555 = vld [vmem:[%s4 + $0x50] sm:$0xf]
        %v556 = vld [vmem:[%s4 + $0x54] sm:$0xf]
        %v557 = vld [vmem:[%s4 + $0x58] sm:$0xf]
        %v558 = vld [vmem:[%s4 + $0x5c] sm:$0xf]
        %v559 = vld [vmem:[%s4 + $0x60] sm:$0xf]
        %v560 = vld [vmem:[%s4 + $0x64] sm:$0xf]
        %v561 = vld [vmem:[%s4 + $0x68] sm:$0xf]
        %v562 = vld [vmem:[%s4 + $0x6c] sm:$0xf]
        %v563 = vld [vmem:[%s4 + $0x70] sm:$0xf]
        %v564 = vld [vmem:[%s4 + $0x74] sm:$0xf]
        %v565 = vld [vmem:[%s4 + $0x78] sm:$0xf]
        %v566 = vld [vmem:[%s4 + $0x7c] sm:$0xf]
        %v567 = vld [vmem:[%s4 + $0x80] sm:$0xf]
        %v568 = vld [vmem:[%s4 + $0x84] sm:$0xf]
        %v569 = vld [vmem:[%s4 + $0x88] sm:$0xf]
        %v570 = vld [vmem:[%s4 + $0x8c] sm:$0xf]
        %v571 = vld [vmem:[%s4 + $0x90] sm:$0xf]
        %v572 = vld [vmem:[%s4 + $0x94] sm:$0xf]
        %v573 = vld [vmem:[%s4 + $0x98] sm:$0xf]
        %v574 = vld [vmem:[%s4 + $0x9c] sm:$0xf]
        %v575 = vld [vmem:[%s4 + $0xa0] sm:$0xf]
        %v576 = vld [vmem:[%s4 + $0xa4] sm:$0xf]
        %v577 = vld [vmem:[%s4 + $0xa8] sm:$0xf]
        %v578 = vld [vmem:[%s4 + $0xac] sm:$0xf]
        %v579 = vld [vmem:[%s4 + $0xb0] sm:$0xf]
        %v580 = vld [vmem:[%s4 + $0xb4] sm:$0xf]
        %v581 = vld [vmem:[%s4 + $0xb8] sm:$0xf]
        %v582 = vld [vmem:[%s4 + $0xbc] sm:$0xf]
        %v583 = vld [vmem:[%s4 + $0xc0] sm:$0xf]
        %v584 = vld [vmem:[%s4 + $0xc4] sm:$0xf]
        %v585 = vld [vmem:[%s4 + $0xc8] sm:$0xf]
        %v586 = vld [vmem:[%s4 + $0xcc] sm:$0xf]
        %v587 = vld [vmem:[%s4 + $0xd0] sm:$0xf]
        %v588 = vld [vmem:[%s4 + $0xd4] sm:$0xf]
        %v589 = vld [vmem:[%s4 + $0xd8] sm:$0xf]
        %v590 = vld [vmem:[%s4 + $0xdc] sm:$0xf]
        %v591 = vld [vmem:[%s4 + $0xe0] sm:$0xf]
        %v592 = vld [vmem:[%s4 + $0xe4] sm:$0xf]
        %v593 = vld [vmem:[%s4 + $0xe8] sm:$0xf]
        %v594 = vld [vmem:[%s4 + $0xec] sm:$0xf]
        %v595 = vld [vmem:[%s4 + $0xf0] sm:$0xf]
        %v596 = vld [vmem:[%s4 + $0xf4] sm:$0xf]
        %v597 = vld [vmem:[%s4 + $0xf8] sm:$0xf]
        %v598 = vld [vmem:[%s4 + $0xfc] sm:$0xf]
        %v600 = vperm.slane %v534, 0
        %v601 = vperm.slane %v534, 1
        %v606 = vunpack.c.l.b16 %v514
        %v607 = vunpack.c.l.b16 %v516
        %v608 = vpack.c.b16 %v607, %v606
        %v626 = vunpack.c.l.b16 %v518
        %v627 = vunpack.c.h.b16 %v518
        %v628 = vunpack.c.l.b16 %v519
        %v629 = vunpack.c.h.b16 %v519
        %v630 = vunpack.c.l.b16 %v520
        %v631 = vunpack.c.h.b16 %v520
        %v632 = vunpack.c.l.b16 %v521
        %v633 = vunpack.c.h.b16 %v521
        %v634 = vunpack.c.l.b16 %v522
        %v635 = vunpack.c.h.b16 %v522
        %v636 = vunpack.c.l.b16 %v523
        %v637 = vunpack.c.h.b16 %v523
        %v638 = vunpack.c.l.b16 %v524
        %v639 = vunpack.c.h.b16 %v524
        %v640 = vunpack.c.l.b16 %v525
        %v641 = vunpack.c.h.b16 %v525
        %v642 = vunpack.c.l.b16 %v526
        %v643 = vunpack.c.h.b16 %v526
        %v644 = vunpack.c.l.b16 %v527
        %v645 = vunpack.c.h.b16 %v527
        %v646 = vunpack.c.l.b16 %v528
        %v647 = vunpack.c.h.b16 %v528
        %v648 = vunpack.c.l.b16 %v529
        %v649 = vunpack.c.h.b16 %v529
        %v650 = vunpack.c.l.b16 %v530
        %v651 = vunpack.c.h.b16 %v530
        %v652 = vunpack.c.l.b16 %v531
        %v653 = vunpack.c.h.b16 %v531
        %v654 = vunpack.c.l.b16 %v532
        %v655 = vunpack.c.h.b16 %v532
        %v656 = vunpack.c.l.b16 %v533
        %v657 = vunpack.c.h.b16 %v533
        %v658 = vpack.c.b16 %v628, %v626
        %v659 = vpack.c.b16 %v629, %v627
        %v660 = vpack.c.b16 %v632, %v630
        %v661 = vpack.c.b16 %v633, %v631
        %v662 = vpack.c.b16 %v636, %v634
        %v663 = vpack.c.b16 %v637, %v635
        %v664 = vpack.c.b16 %v640, %v638
        %v665 = vpack.c.b16 %v641, %v639
        %v666 = vpack.c.b16 %v644, %v642
        %v667 = vpack.c.b16 %v645, %v643
        %v668 = vpack.c.b16 %v648, %v646
        %v669 = vpack.c.b16 %v649, %v647
        %v670 = vpack.c.b16 %v652, %v650
        %v671 = vpack.c.b16 %v653, %v651
        %v672 = vpack.c.b16 %v656, %v654
        %v673 = vpack.c.b16 %v657, %v655
        %690 = vmatpush.bf16.msra.mxu0 %v672
        %691 = vmatpush.bf16.msra.mxu0 %v670
        %692 = vmatpush.bf16.msra.mxu0 %v668
        %693 = vmatpush.bf16.msra.mxu0 %v666
        %694 = vmatpush.bf16.msra.mxu0 %v664
        %695 = vmatpush.bf16.msra.mxu0 %v662
        %696 = vmatpush.bf16.msra.mxu0 %v660
        %697 = vmatpush.bf16.msra.mxu0 %v658
        %698 = vmatmul.bf16.gmra.mxu0 %v608
        %v699 = vpop.f32.mrf.mxu0
        %v700 = vadd.f32 %v600, %v699
        %v701 = vpop.f32.mrf.mxu0
        %v702 = vadd.f32 %v600, %v701
        %703 = vdwg.mxu0
        %704 = vmatpush.bf16.msra.mxu0 %v673
        %705 = vmatpush.bf16.msra.mxu0 %v671
        %706 = vmatpush.bf16.msra.mxu0 %v669
        %707 = vmatpush.bf16.msra.mxu0 %v667
        %708 = vmatpush.bf16.msra.mxu0 %v665
        %709 = vmatpush.bf16.msra.mxu0 %v663
        %710 = vmatpush.bf16.msra.mxu0 %v661
        %711 = vmatpush.bf16.msra.mxu0 %v659
        %712 = vmatmul.bf16.gmra.mxu0 %v608
        %v713 = vpop.f32.mrf.mxu0
        %v714 = vadd.f32 %v601, %v713
        %v715 = vpop.f32.mrf.mxu0
        %v716 = vadd.f32 %v601, %v715
        %717 = vdwg.mxu0
        %v718 = vsub.f32 0.0, %v700
        %v719 = vsub.f32 0.0, %v714
        %v720 = vsub.f32 0.0, %v702
        %v721 = vsub.f32 0.0, %v716
        %v722 = vmul.f32 %v718, 1.442695
        %v723 = vpow.pop %v722
        %v724 = vmul.f32 %v719, 1.442695
        %v725 = vpow.pop %v724
        %v726 = vmul.f32 %v720, 1.442695
        %v727 = vpow.pop %v726
        %v728 = vmul.f32 %v721, 1.442695
        %v729 = vpow.pop %v728
        %v730 = vadd.f32 %v723, 1.0
        %v731 = vadd.f32 %v725, 1.0
        %v732 = vadd.f32 %v727, 1.0
        %v733 = vadd.f32 %v729, 1.0
        %v734 = vrcp.pop %v730
        %v735 = vrcp.pop %v731
        %v736 = vrcp.pop %v732
        %v737 = vrcp.pop %v733
        %v738 = vpack.c.bf16 %v735, %v734
        %v739 = vpack.c.bf16 %v737, %v736
        %v740 = vunpack.c.l.bf16 %v738
        %v741 = vunpack.c.l.bf16 %v739
        %v742 = vunpack.c.l.bf16 %v514
        %v743 = vunpack.c.l.bf16 %v516
        %v744 = vmul.f32 %v740, %v742
        %v745 = vmul.f32 %v741, %v743
        %v746 = vpack.c.bf16 %v744, %v744
        %v747 = vpack.c.bf16 %v745, %v745
        %v750 = vrot.slane %v738, 4
        %v751 = vrot.slane %v739, 4
        %v754 = vunpack.c.l.bf16 %v750
        %v755 = vunpack.c.l.bf16 %v751
        %v756 = vmul.f32 %v754, %v742
        %v757 = vmul.f32 %v755, %v743
        %v758 = vpack.c.bf16 %v756, %v756
        %v759 = vpack.c.bf16 %v757, %v757
        %v760 = vunpack.c.h.b16 %v514
        %v761 = vunpack.c.h.b16 %v516
        %v762 = vpack.c.b16 %v761, %v760
        %764 = vmatpush.bf16.msra.mxu0 %v672
        %765 = vmatpush.bf16.msra.mxu0 %v670
        %766 = vmatpush.bf16.msra.mxu0 %v668
        %767 = vmatpush.bf16.msra.mxu0 %v666
        %768 = vmatpush.bf16.msra.mxu0 %v664
        %769 = vmatpush.bf16.msra.mxu0 %v662
        %770 = vmatpush.bf16.msra.mxu0 %v660
        %771 = vmatpush.bf16.msra.mxu0 %v658
        %772 = vmatmul.bf16.gmra.mxu0 %v762
        %v773 = vpop.f32.mrf.mxu0
        %v774 = vadd.f32 %v600, %v773
        %v775 = vpop.f32.mrf.mxu0
        %v776 = vadd.f32 %v600, %v775
        %777 = vdwg.mxu0
        %778 = vmatpush.bf16.msra.mxu0 %v673
        %779 = vmatpush.bf16.msra.mxu0 %v671
        %780 = vmatpush.bf16.msra.mxu0 %v669
        %781 = vmatpush.bf16.msra.mxu0 %v667
        %782 = vmatpush.bf16.msra.mxu0 %v665
        %783 = vmatpush.bf16.msra.mxu0 %v663
        %784 = vmatpush.bf16.msra.mxu0 %v661
        %785 = vmatpush.bf16.msra.mxu0 %v659
        %786 = vmatmul.bf16.gmra.mxu0 %v762
        %v787 = vpop.f32.mrf.mxu0
        %v788 = vadd.f32 %v601, %v787
        %v789 = vpop.f32.mrf.mxu0
        %v790 = vadd.f32 %v601, %v789
        %791 = vdwg.mxu0
        %v792 = vsub.f32 0.0, %v774
        %v793 = vsub.f32 0.0, %v788
        %v794 = vsub.f32 0.0, %v776
        %v795 = vsub.f32 0.0, %v790
        %v796 = vmul.f32 %v792, 1.442695
        %v797 = vpow.pop %v796
        %v798 = vmul.f32 %v793, 1.442695
        %v799 = vpow.pop %v798
        %v800 = vmul.f32 %v794, 1.442695
        %v801 = vpow.pop %v800
        %v802 = vmul.f32 %v795, 1.442695
        %v803 = vpow.pop %v802
        %v804 = vadd.f32 %v797, 1.0
        %v805 = vadd.f32 %v799, 1.0
        %v806 = vadd.f32 %v801, 1.0
        %v807 = vadd.f32 %v803, 1.0
        %v808 = vrcp.pop %v804
        %v809 = vrcp.pop %v805
        %v810 = vrcp.pop %v806
        %v811 = vrcp.pop %v807
        %v812 = vpack.c.bf16 %v809, %v808
        %v813 = vpack.c.bf16 %v811, %v810
        %v814 = vunpack.c.l.bf16 %v812
        %v815 = vunpack.c.l.bf16 %v813
        %v816 = vrot.slane %v514, 4
        %v817 = vrot.slane %v516, 4
        %v820 = vunpack.c.l.bf16 %v816
        %v821 = vunpack.c.l.bf16 %v817
        %v822 = vmul.f32 %v814, %v820
        %v823 = vmul.f32 %v815, %v821
        %v824 = vpack.c.bf16 %v822, %v822
        %v825 = vpack.c.bf16 %v823, %v823
        %v828 = vrot.slane %v812, 4
        %v829 = vrot.slane %v813, 4
        %v832 = vunpack.c.l.bf16 %v828
        %v833 = vunpack.c.l.bf16 %v829
        %v834 = vmul.f32 %v832, %v820
        %v835 = vmul.f32 %v833, %v821
        %v836 = vpack.c.bf16 %v834, %v834
        %v837 = vpack.c.bf16 %v835, %v835
        %v840 = vunpack.c.l.b16 %v515
        %v841 = vunpack.c.l.b16 %v517
        %v842 = vpack.c.b16 %v841, %v840
        %844 = vmatpush.bf16.msra.mxu0 %v672
        %845 = vmatpush.bf16.msra.mxu0 %v670
        %846 = vmatpush.bf16.msra.mxu0 %v668
        %847 = vmatpush.bf16.msra.mxu0 %v666
        %848 = vmatpush.bf16.msra.mxu0 %v664
        %849 = vmatpush.bf16.msra.mxu0 %v662
        %850 = vmatpush.bf16.msra.mxu0 %v660
        %851 = vmatpush.bf16.msra.mxu0 %v658
        %852 = vmatmul.bf16.gmra.mxu0 %v842
        %v853 = vpop.f32.mrf.mxu0
        %v854 = vadd.f32 %v600, %v853
        %v855 = vpop.f32.mrf.mxu0
        %v856 = vadd.f32 %v600, %v855
        %857 = vdwg.mxu0
        %858 = vmatpush.bf16.msra.mxu0 %v673
        %859 = vmatpush.bf16.msra.mxu0 %v671
        %860 = vmatpush.bf16.msra.mxu0 %v669
        %861 = vmatpush.bf16.msra.mxu0 %v667
        %862 = vmatpush.bf16.msra.mxu0 %v665
        %863 = vmatpush.bf16.msra.mxu0 %v663
        %864 = vmatpush.bf16.msra.mxu0 %v661
        %865 = vmatpush.bf16.msra.mxu0 %v659
        %866 = vmatmul.bf16.gmra.mxu0 %v842
        %v867 = vpop.f32.mrf.mxu0
        %v868 = vadd.f32 %v601, %v867
        %v869 = vpop.f32.mrf.mxu0
        %v870 = vadd.f32 %v601, %v869
        %871 = vdwg.mxu0
        %v872 = vsub.f32 0.0, %v854
        %v873 = vsub.f32 0.0, %v868
        %v874 = vsub.f32 0.0, %v856
        %v875 = vsub.f32 0.0, %v870
        %v876 = vmul.f32 %v872, 1.442695
        %v877 = vpow.pop %v876
        %v878 = vmul.f32 %v873, 1.442695
        %v879 = vpow.pop %v878
        %v880 = vmul.f32 %v874, 1.442695
        %v881 = vpow.pop %v880
        %v882 = vmul.f32 %v875, 1.442695
        %v883 = vpow.pop %v882
        %v884 = vadd.f32 %v877, 1.0
        %v885 = vadd.f32 %v879, 1.0
        %v886 = vadd.f32 %v881, 1.0
        %v887 = vadd.f32 %v883, 1.0
        %v888 = vrcp.pop %v884
        %v889 = vrcp.pop %v885
        %v890 = vrcp.pop %v886
        %v891 = vrcp.pop %v887
        %v892 = vpack.c.bf16 %v889, %v888
        %v893 = vpack.c.bf16 %v891, %v890
        %v894 = vunpack.c.l.bf16 %v892
        %v895 = vunpack.c.l.bf16 %v893
        %v896 = vunpack.c.l.bf16 %v515
        %v897 = vunpack.c.l.bf16 %v517
        %v898 = vmul.f32 %v894, %v896
        %v899 = vmul.f32 %v895, %v897
        %v900 = vpack.c.bf16 %v898, %v898
        %v901 = vpack.c.bf16 %v899, %v899
        %v904 = vrot.slane %v892, 4
        %v905 = vrot.slane %v893, 4
        %v908 = vunpack.c.l.bf16 %v904
        %v909 = vunpack.c.l.bf16 %v905
        %v910 = vmul.f32 %v908, %v896
        %v911 = vmul.f32 %v909, %v897
        %v912 = vpack.c.bf16 %v910, %v910
        %v913 = vpack.c.bf16 %v911, %v911
        %v914 = vunpack.c.h.b16 %v515
        %v915 = vunpack.c.h.b16 %v517
        %v916 = vpack.c.b16 %v915, %v914
        %918 = vmatpush.bf16.msra.mxu0 %v672
        %919 = vmatpush.bf16.msra.mxu0 %v670
        %920 = vmatpush.bf16.msra.mxu0 %v668
        %921 = vmatpush.bf16.msra.mxu0 %v666
        %922 = vmatpush.bf16.msra.mxu0 %v664
        %923 = vmatpush.bf16.msra.mxu0 %v662
        %924 = vmatpush.bf16.msra.mxu0 %v660
        %925 = vmatpush.bf16.msra.mxu0 %v658
        %926 = vmatmul.bf16.gmra.mxu0 %v916
        %v927 = vpop.f32.mrf.mxu0
        %v928 = vadd.f32 %v600, %v927
        %v929 = vpop.f32.mrf.mxu0
        %v930 = vadd.f32 %v600, %v929
        %931 = vdwg.mxu0
        %932 = vmatpush.bf16.msra.mxu0 %v673
        %933 = vmatpush.bf16.msra.mxu0 %v671
        %934 = vmatpush.bf16.msra.mxu0 %v669
        %935 = vmatpush.bf16.msra.mxu0 %v667
        %936 = vmatpush.bf16.msra.mxu0 %v665
        %937 = vmatpush.bf16.msra.mxu0 %v663
        %938 = vmatpush.bf16.msra.mxu0 %v661
        %939 = vmatpush.bf16.msra.mxu0 %v659
        %940 = vmatmul.bf16.gmra.mxu0 %v916
        %v941 = vpop.f32.mrf.mxu0
        %v942 = vadd.f32 %v601, %v941
        %v943 = vpop.f32.mrf.mxu0
        %v944 = vadd.f32 %v601, %v943
        %945 = vdwg.mxu0
        %v946 = vsub.f32 0.0, %v928
        %v947 = vsub.f32 0.0, %v942
        %v948 = vsub.f32 0.0, %v930
        %v949 = vsub.f32 0.0, %v944
        %v950 = vmul.f32 %v946, 1.442695
        %v951 = vpow.pop %v950
        %v952 = vmul.f32 %v947, 1.442695
        %v953 = vpow.pop %v952
        %v954 = vmul.f32 %v948, 1.442695
        %v955 = vpow.pop %v954
        %v956 = vmul.f32 %v949, 1.442695
        %v957 = vpow.pop %v956
        %v958 = vadd.f32 %v951, 1.0
        %v959 = vadd.f32 %v953, 1.0
        %v960 = vadd.f32 %v955, 1.0
        %v961 = vadd.f32 %v957, 1.0
        %v962 = vrcp.pop %v958
        %v963 = vrcp.pop %v959
        %v964 = vrcp.pop %v960
        %v965 = vrcp.pop %v961
        %v966 = vpack.c.bf16 %v963, %v962
        %v967 = vpack.c.bf16 %v965, %v964
        %v968 = vunpack.c.l.bf16 %v966
        %v969 = vunpack.c.l.bf16 %v967
        %v970 = vrot.slane %v515, 4
        %v971 = vrot.slane %v517, 4
        %v974 = vunpack.c.l.bf16 %v970
        %v975 = vunpack.c.l.bf16 %v971
        %v976 = vmul.f32 %v968, %v974
        %v977 = vmul.f32 %v969, %v975
        %v978 = vpack.c.bf16 %v976, %v976
        %v979 = vpack.c.bf16 %v977, %v977
        %v982 = vrot.slane %v966, 4
        %v983 = vrot.slane %v967, 4
        %v986 = vunpack.c.l.bf16 %v982
        %v987 = vunpack.c.l.bf16 %v983
        %v988 = vmul.f32 %v986, %v974
        %v989 = vmul.f32 %v987, %v975
        %v990 = vpack.c.bf16 %v988, %v988
        %v991 = vpack.c.bf16 %v989, %v989
        %v994 = vunpack.c.l.b16 %v746
        %v995 = vunpack.c.l.b16 %v747
        %v996 = vpack.c.b16 %v995, %v994
        %v1000 = vunpack.c.l.b16 %v824
        %v1001 = vunpack.c.l.b16 %v825
        %v1002 = vpack.c.b16 %v1001, %v1000
        %v1006 = vunpack.c.l.b16 %v900
        %v1007 = vunpack.c.l.b16 %v901
        %v1008 = vpack.c.b16 %v1007, %v1006
        %v1012 = vunpack.c.l.b16 %v978
        %v1013 = vunpack.c.l.b16 %v979
        %v1014 = vpack.c.b16 %v1013, %v1012
        %v1080 = vunpack.c.l.b16 %v535
        %v1081 = vunpack.c.l.b16 %v536
        %v1082 = vunpack.c.l.b16 %v537
        %v1083 = vunpack.c.l.b16 %v538
        %v1084 = vunpack.c.l.b16 %v539
        %v1085 = vunpack.c.l.b16 %v540
        %v1086 = vunpack.c.l.b16 %v541
        %v1087 = vunpack.c.l.b16 %v542
        %v1088 = vunpack.c.l.b16 %v543
        %v1089 = vunpack.c.l.b16 %v544
        %v1090 = vunpack.c.l.b16 %v545
        %v1091 = vunpack.c.l.b16 %v546
        %v1092 = vunpack.c.l.b16 %v547
        %v1093 = vunpack.c.l.b16 %v548
        %v1094 = vunpack.c.l.b16 %v549
        %v1095 = vunpack.c.l.b16 %v550
        %v1096 = vunpack.c.l.b16 %v551
        %v1097 = vunpack.c.l.b16 %v552
        %v1098 = vunpack.c.l.b16 %v553
        %v1099 = vunpack.c.l.b16 %v554
        %v1100 = vunpack.c.l.b16 %v555
        %v1101 = vunpack.c.l.b16 %v556
        %v1102 = vunpack.c.l.b16 %v557
        %v1103 = vunpack.c.l.b16 %v558
        %v1104 = vunpack.c.l.b16 %v559
        %v1105 = vunpack.c.l.b16 %v560
        %v1106 = vunpack.c.l.b16 %v561
        %v1107 = vunpack.c.l.b16 %v562
        %v1108 = vunpack.c.l.b16 %v563
        %v1109 = vunpack.c.l.b16 %v564
        %v1110 = vunpack.c.l.b16 %v565
        %v1111 = vunpack.c.l.b16 %v566
        %v1112 = vunpack.c.l.b16 %v567
        %v1113 = vunpack.c.l.b16 %v568
        %v1114 = vunpack.c.l.b16 %v569
        %v1115 = vunpack.c.l.b16 %v570
        %v1116 = vunpack.c.l.b16 %v571
        %v1117 = vunpack.c.l.b16 %v572
        %v1118 = vunpack.c.l.b16 %v573
        %v1119 = vunpack.c.l.b16 %v574
        %v1120 = vunpack.c.l.b16 %v575
        %v1121 = vunpack.c.l.b16 %v576
        %v1122 = vunpack.c.l.b16 %v577
        %v1123 = vunpack.c.l.b16 %v578
        %v1124 = vunpack.c.l.b16 %v579
        %v1125 = vunpack.c.l.b16 %v580
        %v1126 = vunpack.c.l.b16 %v581
        %v1127 = vunpack.c.l.b16 %v582
        %v1128 = vunpack.c.l.b16 %v583
        %v1129 = vunpack.c.l.b16 %v584
        %v1130 = vunpack.c.l.b16 %v585
        %v1131 = vunpack.c.l.b16 %v586
        %v1132 = vunpack.c.l.b16 %v587
        %v1133 = vunpack.c.l.b16 %v588
        %v1134 = vunpack.c.l.b16 %v589
        %v1135 = vunpack.c.l.b16 %v590
        %v1136 = vunpack.c.l.b16 %v591
        %v1137 = vunpack.c.l.b16 %v592
        %v1138 = vunpack.c.l.b16 %v593
        %v1139 = vunpack.c.l.b16 %v594
        %v1140 = vunpack.c.l.b16 %v595
        %v1141 = vunpack.c.l.b16 %v596
        %v1142 = vunpack.c.l.b16 %v597
        %v1143 = vunpack.c.l.b16 %v598
        %v1144 = vpack.c.b16 %v1081, %v1080
        %v1145 = vpack.c.b16 %v1083, %v1082
        %v1146 = vpack.c.b16 %v1085, %v1084
        %v1147 = vpack.c.b16 %v1087, %v1086
        %v1148 = vpack.c.b16 %v1089, %v1088
        %v1149 = vpack.c.b16 %v1091, %v1090
        %v1150 = vpack.c.b16 %v1093, %v1092
        %v1151 = vpack.c.b16 %v1095, %v1094
        %v1152 = vpack.c.b16 %v1097, %v1096
        %v1153 = vpack.c.b16 %v1099, %v1098
        %v1154 = vpack.c.b16 %v1101, %v1100
        %v1155 = vpack.c.b16 %v1103, %v1102
        %v1156 = vpack.c.b16 %v1105, %v1104
        %v1157 = vpack.c.b16 %v1107, %v1106
        %v1158 = vpack.c.b16 %v1109, %v1108
        %v1159 = vpack.c.b16 %v1111, %v1110
        %v1160 = vpack.c.b16 %v1113, %v1112
        %v1161 = vpack.c.b16 %v1115, %v1114
        %v1162 = vpack.c.b16 %v1117, %v1116
        %v1163 = vpack.c.b16 %v1119, %v1118
        %v1164 = vpack.c.b16 %v1121, %v1120
        %v1165 = vpack.c.b16 %v1123, %v1122
        %v1166 = vpack.c.b16 %v1125, %v1124
        %v1167 = vpack.c.b16 %v1127, %v1126
        %v1168 = vpack.c.b16 %v1129, %v1128
        %v1169 = vpack.c.b16 %v1131, %v1130
        %v1170 = vpack.c.b16 %v1133, %v1132
        %v1171 = vpack.c.b16 %v1135, %v1134
        %v1172 = vpack.c.b16 %v1137, %v1136
        %v1173 = vpack.c.b16 %v1139, %v1138
        %v1174 = vpack.c.b16 %v1141, %v1140
        %v1175 = vpack.c.b16 %v1143, %v1142
        %1208 = vmatpush.bf16.msra.mxu0 %v1151
        %1209 = vmatpush.bf16.msra.mxu0 %v1150
        %1210 = vmatpush.bf16.msra.mxu0 %v1149
        %1211 = vmatpush.bf16.msra.mxu0 %v1148
        %1212 = vmatpush.bf16.msra.mxu0 %v1147
        %1213 = vmatpush.bf16.msra.mxu0 %v1146
        %1214 = vmatpush.bf16.msra.mxu0 %v1145
        %1215 = vmatpush.bf16.msra.mxu0 %v1144
        %1216 = vmatmul.bf16.gmra.mxu0 %v996
        %v1217 = vpop.f32.mrf.mxu0
        %v1218 = vadd.f32 0.0, %v1217
        %v1219 = vpop.f32.mrf.mxu0
        %v1220 = vadd.f32 0.0, %v1219
        %1221 = vdwg.mxu0
        %1222 = vmatpush.bf16.msra.mxu0 %v1159
        %1223 = vmatpush.bf16.msra.mxu0 %v1158
        %1224 = vmatpush.bf16.msra.mxu0 %v1157
        %1225 = vmatpush.bf16.msra.mxu0 %v1156
        %1226 = vmatpush.bf16.msra.mxu0 %v1155
        %1227 = vmatpush.bf16.msra.mxu0 %v1154
        %1228 = vmatpush.bf16.msra.mxu0 %v1153
        %1229 = vmatpush.bf16.msra.mxu0 %v1152
        %1230 = vmatmul.bf16.gmra.mxu0 %v1002
        %v1231 = vpop.f32.mrf.mxu0
        %v1232 = vadd.f32 %v1218, %v1231
        %v1233 = vpop.f32.mrf.mxu0
        %v1234 = vadd.f32 %v1220, %v1233
        %1235 = vdwg.mxu0
        %1236 = vmatpush.bf16.msra.mxu0 %v1167
        %1237 = vmatpush.bf16.msra.mxu0 %v1166
        %1238 = vmatpush.bf16.msra.mxu0 %v1165
        %1239 = vmatpush.bf16.msra.mxu0 %v1164
        %1240 = vmatpush.bf16.msra.mxu0 %v1163
        %1241 = vmatpush.bf16.msra.mxu0 %v1162
        %1242 = vmatpush.bf16.msra.mxu0 %v1161
        %1243 = vmatpush.bf16.msra.mxu0 %v1160
        %1244 = vmatmul.bf16.gmra.mxu0 %v1008
        %v1245 = vpop.f32.mrf.mxu0
        %v1246 = vadd.f32 %v1232, %v1245
        %v1247 = vpop.f32.mrf.mxu0
        %v1248 = vadd.f32 %v1234, %v1247
        %1249 = vdwg.mxu0
        %1250 = vmatpush.bf16.msra.mxu0 %v1175
        %1251 = vmatpush.bf16.msra.mxu0 %v1174
        %1252 = vmatpush.bf16.msra.mxu0 %v1173
        %1253 = vmatpush.bf16.msra.mxu0 %v1172
        %1254 = vmatpush.bf16.msra.mxu0 %v1171
        %1255 = vmatpush.bf16.msra.mxu0 %v1170
        %1256 = vmatpush.bf16.msra.mxu0 %v1169
        %1257 = vmatpush.bf16.msra.mxu0 %v1168
        %1258 = vmatmul.bf16.gmra.mxu0 %v1014
        %v1259 = vpop.f32.mrf.mxu0
        %v1260 = vadd.f32 %v1246, %v1259
        %v1261 = vpop.f32.mrf.mxu0
        %v1262 = vadd.f32 %v1248, %v1261
        %1263 = vdwg.mxu0
        %1264 = vst [vmem:[%s238] sm:$0xff] %v1260
        %1265 = vst [vmem:[%s238 + $0x8] sm:$0xff] %v1262
        %v1268 = vunpack.c.l.b16 %v758
        %v1269 = vunpack.c.l.b16 %v759
        %v1270 = vpack.c.b16 %v1269, %v1268
        %v1274 = vunpack.c.l.b16 %v836
        %v1275 = vunpack.c.l.b16 %v837
        %v1276 = vpack.c.b16 %v1275, %v1274
        %v1280 = vunpack.c.l.b16 %v912
        %v1281 = vunpack.c.l.b16 %v913
        %v1282 = vpack.c.b16 %v1281, %v1280
        %v1286 = vunpack.c.l.b16 %v990
        %v1287 = vunpack.c.l.b16 %v991
        %v1288 = vpack.c.b16 %v1287, %v1286
        %1290 = vmatpush.bf16.msra.mxu0 %v1151
        %1291 = vmatpush.bf16.msra.mxu0 %v1150
        %1292 = vmatpush.bf16.msra.mxu0 %v1149
        %1293 = vmatpush.bf16.msra.mxu0 %v1148
        %1294 = vmatpush.bf16.msra.mxu0 %v1147
        %1295 = vmatpush.bf16.msra.mxu0 %v1146
        %1296 = vmatpush.bf16.msra.mxu0 %v1145
        %1297 = vmatpush.bf16.msra.mxu0 %v1144
        %1298 = vmatmul.bf16.gmra.mxu0 %v1270
        %v1299 = vpop.f32.mrf.mxu0
        %v1300 = vadd.f32 0.0, %v1299
        %v1301 = vpop.f32.mrf.mxu0
        %v1302 = vadd.f32 0.0, %v1301
        %1303 = vdwg.mxu0
        %1304 = vmatpush.bf16.msra.mxu0 %v1159
        %1305 = vmatpush.bf16.msra.mxu0 %v1158
        %1306 = vmatpush.bf16.msra.mxu0 %v1157
        %1307 = vmatpush.bf16.msra.mxu0 %v1156
        %1308 = vmatpush.bf16.msra.mxu0 %v1155
        %1309 = vmatpush.bf16.msra.mxu0 %v1154
        %1310 = vmatpush.bf16.msra.mxu0 %v1153
        %1311 = vmatpush.bf16.msra.mxu0 %v1152
        %1312 = vmatmul.bf16.gmra.mxu0 %v1276
        %v1313 = vpop.f32.mrf.mxu0
        %v1314 = vadd.f32 %v1300, %v1313
        %v1315 = vpop.f32.mrf.mxu0
        %v1316 = vadd.f32 %v1302, %v1315
        %1317 = vdwg.mxu0
        %1318 = vmatpush.bf16.msra.mxu0 %v1167
        %1319 = vmatpush.bf16.msra.mxu0 %v1166
        %1320 = vmatpush.bf16.msra.mxu0 %v1165
        %1321 = vmatpush.bf16.msra.mxu0 %v1164
        %1322 = vmatpush.bf16.msra.mxu0 %v1163
        %1323 = vmatpush.bf16.msra.mxu0 %v1162
        %1324 = vmatpush.bf16.msra.mxu0 %v1161
        %1325 = vmatpush.bf16.msra.mxu0 %v1160
        %1326 = vmatmul.bf16.gmra.mxu0 %v1282
        %v1327 = vpop.f32.mrf.mxu0
        %v1328 = vadd.f32 %v1314, %v1327
        %v1329 = vpop.f32.mrf.mxu0
        %v1330 = vadd.f32 %v1316, %v1329
        %1331 = vdwg.mxu0
        %1332 = vmatpush.bf16.msra.mxu0 %v1175
        %1333 = vmatpush.bf16.msra.mxu0 %v1174
        %1334 = vmatpush.bf16.msra.mxu0 %v1173
        %1335 = vmatpush.bf16.msra.mxu0 %v1172
        %1336 = vmatpush.bf16.msra.mxu0 %v1171
        %1337 = vmatpush.bf16.msra.mxu0 %v1170
        %1338 = vmatpush.bf16.msra.mxu0 %v1169
        %1339 = vmatpush.bf16.msra.mxu0 %v1168
        %1340 = vmatmul.bf16.gmra.mxu0 %v1288
        %v1341 = vpop.f32.mrf.mxu0
        %v1342 = vadd.f32 %v1328, %v1341
        %v1343 = vpop.f32.mrf.mxu0
        %v1344 = vadd.f32 %v1330, %v1343
        %1345 = vdwg.mxu0
        %s1346 = scalar_lea.vmem %s238, 16 [#allocation2]
        %1347 = vst [vmem:[%s1346] sm:$0xff] %v1342
        %1348 = vst [vmem:[%s1346 + $0x8] sm:$0xff] %v1344
        %s1349 = sand.u32 %s150, 1
        %s1350 = sand.u32 %s150, 1
        %s1351 = smul.addr %s1350, 32
        %s1352 = scalar_lea.vmem [#allocation2], %s1351
        // Predicated region
        $region41: #{encoder_masker_decoder.1} parent=39 // pred_check
          %p1353 = pneg %p160
        $region42: #{encoder_masker_decoder.1} parent=39 // pred_check_branch
          %1355 = sbr.rel (%p1353) target = $region44
        $region43: #{encoder_masker_decoder.1} parent=39 // pred_region
          %s1356 = smul.u32 2, %s21
          %s1357 = smul.addr %s20, 8
          %s1358 = sadd.s32 %s1356, %s1357
          %s1359 = smul.addr %s1358, 8
          %s1360 = scalar_lea.vmem %s5, %s1359
          // Predicated region
          $region45: #{encoder_masker_decoder.1} parent=43 // pred_check
            _
          $region46: #{encoder_masker_decoder.1} parent=43 // pred_check_branch
            %1362 = sbr.rel (0) target = $region48
          $region47: #{encoder_masker_decoder.1} parent=43 // pred_region
            // Predicated region
            $region49: #{encoder_masker_decoder.1} parent=47 // pred_check
              _
            $region50: #{encoder_masker_decoder.1} parent=47 // pred_check_branch
              %1364 = sbr.rel (0) target = $region52
            $region51: #{encoder_masker_decoder.1} parent=47 // pred_region
              // Predicated region
              $region64: #{encoder_masker_decoder.1} parent=51 // pred_check
                _
              $region65: #{encoder_masker_decoder.1} parent=51 // pred_check_branch
                %1386 = sbr.rel (0) target = $region67
              $region66: #{encoder_masker_decoder.1} parent=51 // pred_region
                loop: start=0, step=1, limit=1
                $region68: #{encoder_masker_decoder.1} parent=66 // loop_pre_header
                  _
                $region69: #{encoder_masker_decoder.1} parent=66 // loop_header
                  %s1388 = sphi 0, %s1392
                  %p1389 = scmp.ge.s32.totalorder %s1388, 1
                  %s1393 = sphi %s1352, %s1352
                  %s1394 = sphi %s1360, %s1360
                $region70: #{encoder_masker_decoder.1} parent=66 // loop_header_branch
                  %1391 = sbr.rel (%p1389) target = $region74
                $region71: #{encoder_masker_decoder.1} parent=66 // loop_body
                  %v1395 = vld [vmem:[%s1393] sm:$0xff]
                  %1396 = vst [vmem:[%s1394] sm:$0xff] %v1395
                  %v1397 = vld [vmem:[%s1393 + $0x8] sm:$0xff]
                  %1398 = vst [vmem:[%s1394 + $0x8] sm:$0xff] %v1397
                  %v1399 = vld [vmem:[%s1393 + $0x10] sm:$0xff]
                  %1400 = vst [vmem:[%s1394 + $0x20] sm:$0xff] %v1399
                  %v1401 = vld [vmem:[%s1393 + $0x18] sm:$0xff]
                  %1402 = vst [vmem:[%s1394 + $0x28] sm:$0xff] %v1401
                $region72: #{encoder_masker_decoder.1} parent=66 // loop_footer
                  %s1392 = sadd.s32 1, %s1388
                $region73: #{encoder_masker_decoder.1} parent=66 // loop_footer_branch
                  %1387 = sbr.rel target = $region69
                $region74: #{encoder_masker_decoder.1} parent=66 // loop_exit
                  _
              $region67: #{encoder_masker_decoder.1} parent=51 // pred_fallthru
                _
              // Predicated region
              $region75: #{encoder_masker_decoder.1} parent=51 // pred_check
                _
              $region76: #{encoder_masker_decoder.1} parent=51 // pred_check_branch
                %1404 = sbr.rel target = $region78
              $region77: #{encoder_masker_decoder.1} parent=51 // pred_region
                _
              $region78: #{encoder_masker_decoder.1} parent=51 // pred_fallthru
                _
            $region52: #{encoder_masker_decoder.1} parent=47 // pred_fallthru
              _
            // Predicated region
            $region53: #{encoder_masker_decoder.1} parent=47 // pred_check
              _
            $region54: #{encoder_masker_decoder.1} parent=47 // pred_check_branch
              %1366 = sbr.rel target = $region56
            $region55: #{encoder_masker_decoder.1} parent=47 // pred_region
              %s1368 = ssub.s32 256, 1
              loop: start=0, step=1, limit=1
              $region57: #{encoder_masker_decoder.1} parent=55 // loop_pre_header
                _
              $region58: #{encoder_masker_decoder.1} parent=55 // loop_header
                %s1370 = sphi 0, %s1374
                %p1371 = scmp.ge.s32.totalorder %s1370, 1
                %s1375 = sphi %s1352, %s1352
                %s1376 = sphi %s1360, %s1360
              $region59: #{encoder_masker_decoder.1} parent=55 // loop_header_branch
                %1373 = sbr.rel (%p1371) target = $region63
              $region60: #{encoder_masker_decoder.1} parent=55 // loop_body
                %v1377 = vld [vmem:[%s1375] sm:%s1368]
                %1378 = vst [vmem:[%s1376] sm:%s1368] %v1377
                %v1379 = vld [vmem:[%s1375 + $0x8] sm:%s1368]
                %1380 = vst [vmem:[%s1376 + $0x8] sm:%s1368] %v1379
                %v1381 = vld [vmem:[%s1375 + $0x10] sm:%s1368]
                %1382 = vst [vmem:[%s1376 + $0x20] sm:%s1368] %v1381
                %v1383 = vld [vmem:[%s1375 + $0x18] sm:%s1368]
                %1384 = vst [vmem:[%s1376 + $0x28] sm:%s1368] %v1383
              $region61: #{encoder_masker_decoder.1} parent=55 // loop_footer
                %s1374 = sadd.s32 1, %s1370
              $region62: #{encoder_masker_decoder.1} parent=55 // loop_footer_branch
                %1369 = sbr.rel target = $region58
              $region63: #{encoder_masker_decoder.1} parent=55 // loop_exit
                _
            $region56: #{encoder_masker_decoder.1} parent=47 // pred_fallthru
              _
          $region48: #{encoder_masker_decoder.1} parent=43 // pred_fallthru
            _
          %1405 = vnop
        $region44: #{encoder_masker_decoder.1} parent=39 // pred_fallthru
          _
      $region40: #{encoder_masker_decoder.1} parent=5 // pred_fallthru
        _
      %p1406 = scmp.le.s32.totalorder 2, %s11
      // Predicated region
      $region79: #{encoder_masker_decoder.1} parent=5 // pred_check
        %p1407 = pneg %p1406
      $region80: #{encoder_masker_decoder.1} parent=5 // pred_check_branch
        %1409 = sbr.rel (%p1407) target = $region82
      $region81: #{encoder_masker_decoder.1} parent=5 // pred_region
        %s1410 = ssub.s32 %s11, 2
        // Predicated region
        $region83: #{encoder_masker_decoder.1} parent=81 // pred_check
          %p1411 = pneg %p166
        $region84: #{encoder_masker_decoder.1} parent=81 // pred_check_branch
          %1413 = sbr.rel (%p1411) target = $region86
        $region85: #{encoder_masker_decoder.1} parent=81 // pred_region
          %s1414 = sand.u32 %s151, 1
          %s1415 = sand.u32 %s151, 1
          %s1416 = smul.addr %s1415, 32
          %s1417 = scalar_lea.vmem [#allocation2], %s1416
        $region86: #{encoder_masker_decoder.1} parent=81 // pred_fallthru
          _
      $region82: #{encoder_masker_decoder.1} parent=5 // pred_fallthru
        _
    $region6: #{encoder_masker_decoder.1} parent=1 // loop_footer
      %s15 = sadd.s32 1, %s11
    $region7: #{encoder_masker_decoder.1} parent=1 // loop_footer_branch
      %10 = sbr.rel target = $region3
    $region8: #{encoder_masker_decoder.1} parent=1 // loop_exit
      _

</llo_original>
